<compile_context>
chip_gen: v6e
topology: v6e:2x2x1
jax: 0.10.0
libtpu: 0.0.40
codegen_flags: <defaults>
</compile_context>

<pallas_src>
import functools
import math

import jax
import jax.numpy as jnp
from jax import lax
from jax.experimental import pallas as pl
from jax.experimental.pallas import tpu as pltpu

REL_K = 10          # rel_k_heights
LN_EPS = 1e-5       # torch.nn.LayerNorm default eps


def _silu(x):
    return x * jax.nn.sigmoid(x)


def pgau_kernel(top_ref, bot_ref, code_ref,
                w_init_ref, b_init_ref, ln_g_ref, ln_b_ref,
                w_u_ref, b_u_ref, w_z_ref, b_z_ref, w_v_ref, b_v_ref,
                gamma_ref, beta_ref, embed_ref,
                w_out_ref, b_out_ref, w_go_ref, w_gr_ref, b_gate_ref,
                out_ref,
                *, B, S0, S1, D, d, inv_scaling):
    f32 = jnp.float32
    bf16 = jnp.bfloat16

    top = top_ref[...]                      # (B, S0, D) f32 — doubles as the residual
    bot = bot_ref[...]                      # (B, S1, D) f32

    top2 = top.reshape(B * S0, D)
    bot2 = bot.reshape(B * S1, D)

    # ---- initial_transform: Linear + LayerNorm (bf16 MXU operands, f32 stats) ----
    def init_ln(x2):
        h = jnp.dot(x2.astype(bf16), w_init_ref[...],
                    preferred_element_type=f32) + b_init_ref[...]
        mu = jnp.mean(h, axis=-1, keepdims=True)
        var = jnp.mean((h - mu) ** 2, axis=-1, keepdims=True)
        return (h - mu) * lax.rsqrt(var + LN_EPS) * ln_g_ref[...] + ln_b_ref[...]

    h_top = init_ln(top2)                   # (B*S0, D) f32
    h_bot = init_ln(bot2)                   # (B*S1, D) f32
    h_top_b = h_top.astype(bf16)
    h_bot_b = h_bot.astype(bf16)

    # ---- U/Z/V projections — only the rows that are actually used ----
    def proj(hb, w_ref, b_ref):
        return _silu(jnp.dot(hb, w_ref[...], preferred_element_type=f32) + b_ref[...])

    u = proj(h_top_b, w_u_ref, b_u_ref)         # (B*S0, 2D)
    z_top = proj(h_top_b, w_z_ref, b_z_ref)     # (B*S0, d)
    z_bot = proj(h_bot_b, w_z_ref, b_z_ref)     # (B*S1, d)
    v = proj(h_bot_b, w_v_ref, b_v_ref)         # (B*S1, 2D)

    # ---- OffsetScale ----
    gam = gamma_ref[...]
    bet = beta_ref[...]
    q = z_top * gam[0:1, :] + bet[0:1, :]       # (B*S0, d)
    qp = z_top * gam[1:2, :] + bet[1:2, :]      # (B*S0, d)
    k = z_bot * gam[2:3, :] + bet[2:3, :]       # (B*S1, d)

    # height-embedding energy (tiny matmul; kept f32 so softmax logits stay precise)
    qh = lax.dot_general(qp, embed_ref[...], (((1,), (1,)), ((), ())),
                         preferred_element_type=f32)          # (B*S0, REL_K)

    # ---- batched attention over the whole tile ----
    q3 = q.reshape(B, S0, d)
    k3 = k.reshape(B, S1, d)
    qh3 = qh.reshape(B, S0, REL_K)
    energy = jnp.einsum('bqd,bkd->bqk', q3, k3,
                        preferred_element_type=f32)           # (B, S0, S1)

    # code: -1 == masked, otherwise precomputed rel-height bucket in [0, REL_K)
    code = code_ref[...].astype(jnp.int32)                    # (B, S0, S1)
    rel_energy = jnp.broadcast_to(qh3[:, :, 0:1], (B, S0, S1))
    for hh in range(1, REL_K):                                # select chain (REL_K=10)
        rel_energy = jnp.where(code == hh, qh3[:, :, hh:hh + 1], rel_energy)

    logits = (energy + rel_energy) * inv_scaling
    logits = jnp.where(code < 0, -9999.0, logits)             # masked_fill(-9999)
    m = jnp.max(logits, axis=-1, keepdims=True)
    e = jnp.exp(logits - m)
    attn = e * pl.reciprocal(jnp.sum(e, axis=-1, keepdims=True), approx=True)

    v3 = v.reshape(B, S1, 2 * D)
    v_att = jnp.einsum('bqk,bkd->bqd', attn.astype(bf16), v3.astype(bf16),
                       preferred_element_type=f32)            # (B, S0, 2D)

    # ---- tail: out projection + gate (gate split to avoid the concat buffer) ----
    uv = (u.reshape(B, S0, 2 * D) * v_att).reshape(B * S0, 2 * D)
    # TODO(synk): Dropout(p=0.1) after out_transform's Linear omitted (eval mode).
    out0 = jnp.dot(uv.astype(bf16), w_out_ref[...],
                   preferred_element_type=f32) + b_out_ref[...]   # (B*S0, D) f32

    res0 = top2                                                   # residual, f32
    g_logit = (jnp.dot(out0.astype(bf16), w_go_ref[...], preferred_element_type=f32)
               + jnp.dot(res0.astype(bf16), w_gr_ref[...], preferred_element_type=f32)
               + b_gate_ref[...])
    gates = jax.nn.sigmoid(g_logit)
    out_ref[...] = (gates * out0 + (1.0 - gates) * res0).reshape(B, S0, D)


def _vmem_limit_bytes():
    # ~75% of physical VMEM, capped at 100 MiB (fits v5e/v6e 128 MiB, v7x 64 MiB).
    try:
        cap = int(pltpu.get_tpu_info().vmem_capacity_bytes)
    except Exception:
        cap = 64 * 1024 * 1024
    return min((cap * 3) // 4, 100 * 1024 * 1024)


def pgau_pallas(params, sequence, attention_mask, heights, *, b_tile=None):
    N, S, D = sequence.shape
    S0 = (S - 1) // 2
    S1 = S - S0
    d = params['w_z'].shape[1]
    inv_scaling = 1.0 / math.sqrt(2 * d)

    if b_tile is None:
        # >=2 grid steps when possible (v7x megacore) with a modest per-step block.
        b_tile = 1 if N <= 1 else max(1, min(N // 2, 16))
    b_tile = max(1, min(b_tile, N))
    n_pad = pl.cdiv(N, b_tile) * b_tile
    pad = n_pad - N

    seq = sequence.astype(jnp.float32)
    seq_top = seq[:, :S0, :]                 # also carries the residual rows
    seq_bot = seq[:, S0:, :]

    # Fold mask + relative-height bucket into one int8 code tensor (-1 == masked).
    mask = attention_mask[:, :S0, S0:].astype(bool)
    rel = (jnp.clip(heights[:, None, S0:].astype(jnp.int32)
                    - heights[:, :S0, None].astype(jnp.int32), 1, REL_K) - 1)
    code = jnp.where(mask, rel, -1).astype(jnp.int8)

    if pad:
        seq_top = jnp.pad(seq_top, ((0, pad), (0, 0), (0, 0)))
        seq_bot = jnp.pad(seq_bot, ((0, pad), (0, 0), (0, 0)))
        code = jnp.pad(code, ((0, pad), (0, 0), (0, 0)))

    bf16 = jnp.bfloat16
    w_gate = params['w_gate']
    weights = [
        params['w_init'].astype(bf16), params['b_init'], params['ln_g'], params['ln_b'],
        params['w_u'].astype(bf16), params['b_u'],
        params['w_z'].astype(bf16), params['b_z'],
        params['w_v'].astype(bf16), params['b_v'],
        params['gamma'], params['beta'], params['embed'],
        params['w_out'].astype(bf16), params['b_out'],
        w_gate[:D].astype(bf16), w_gate[D:].astype(bf16), params['b_gate'],
    ]

    def bcast_spec(arr):
        zeros = (0,) * arr.ndim
        return pl.BlockSpec(arr.shape, lambda n, _z=zeros: _z)

    in_specs = [
        pl.BlockSpec((b_tile, S0, D), lambda n: (n, 0, 0)),    # seq_top (+ residual)
        pl.BlockSpec((b_tile, S1, D), lambda n: (n, 0, 0)),    # seq_bot
        pl.BlockSpec((b_tile, S0, S1), lambda n: (n, 0, 0)),   # mask/rel code (int8)
    ] + [bcast_spec(w) for w in weights]

    kernel = functools.partial(pgau_kernel, B=b_tile, S0=S0, S1=S1,
                               D=D, d=d, inv_scaling=inv_scaling)

    out_top = pl.pallas_call(
        kernel,
        out_shape=jax.ShapeDtypeStruct((n_pad, S0, D), jnp.float32),
        grid=(n_pad // b_tile,),
        in_specs=in_specs,
        out_specs=pl.BlockSpec((b_tile, S0, D), lambda n: (n, 0, 0)),
        compiler_params=pltpu.CompilerParams(
            dimension_semantics=("parallel",),
            vmem_limit_bytes=_vmem_limit_bytes()),
    )(seq_top, seq_bot, code, *weights)

    out_top = out_top[:N]
    # The bottom half of the sequence is untouched by the module: concat in wrapper.
    return jnp.concatenate([out_top, sequence[:, S0:, :]], axis=1)


def init_params(key, D, d):
    ks = jax.random.split(key, 16)
    std = 0.02
    p = {}
    p['w_init'] = jax.random.normal(ks[0], (D, D), jnp.float32) * std
    p['b_init'] = jax.random.normal(ks[1], (1, D), jnp.float32) * std
    p['ln_g'] = jnp.ones((1, D), jnp.float32)
    p['ln_b'] = jnp.zeros((1, D), jnp.float32)
    p['w_u'] = jax.random.normal(ks[2], (D, 2 * D), jnp.float32) * std
    p['b_u'] = jax.random.normal(ks[3], (1, 2 * D), jnp.float32) * std
    p['w_v'] = jax.random.normal(ks[4], (D, 2 * D), jnp.float32) * std
    p['b_v'] = jax.random.normal(ks[5], (1, 2 * D), jnp.float32) * std
    p['w_z'] = jax.random.normal(ks[6], (D, d), jnp.float32) * std
    p['b_z'] = jax.random.normal(ks[7], (1, d), jnp.float32) * std
    p['gamma'] = jax.random.normal(ks[8], (3, d), jnp.float32) * 0.02  # OffsetScale init
    p['beta'] = jnp.zeros((3, d), jnp.float32)
    p['embed'] = jax.random.normal(ks[9], (REL_K, d), jnp.float32)     # torch.randn
    p['w_out'] = jax.random.normal(ks[10], (2 * D, D), jnp.float32) * std
    p['b_out'] = jax.random.normal(ks[11], (1, D), jnp.float32) * std
    p['w_gate'] = jax.random.normal(ks[12], (2 * D, D), jnp.float32) * std
    p['b_gate'] = jax.random.normal(ks[13], (1, D), jnp.float32) * std
    return p


def pgau_ref(params, sequence, attention_mask, heights):
    """Pure-JAX f32 reference mirroring the PyTorch forward (eval mode)."""
    N, S, D = sequence.shape
    S0 = (S - 1) // 2
    d = params['w_z'].shape[1]
    scaling = math.sqrt(2 * d)
    res = sequence
    h = sequence @ params['w_init'] + params['b_init']
    mu = h.mean(-1, keepdims=True)
    var = ((h - mu) ** 2).mean(-1, keepdims=True)
    h = (h - mu) / jnp.sqrt(var + LN_EPS) * params['ln_g'] + params['ln_b']
    u = jax.nn.silu(h[:, :S0] @ params['w_u'] + params['b_u'])
    z = jax.nn.silu(h @ params['w_z'] + params['b_z'])
    v = jax.nn.silu(h[:, S0:] @ params['w_v'] + params['b_v'])
    q = z[:, :S0] * params['gamma'][0] + params['beta'][0]
    qp = z[:, :S0] * params['gamma'][1] + params['beta'][1]
    k = z[:, S0:] * params['gamma'][2] + params['beta'][2]
    energy = jnp.einsum('nid,njd->nij', q, k)
    qh = jnp.einsum('nid,hd->nih', qp, params['embed'])
    rel = heights[:, None, :] - heights[:, :, None]
    rel = jnp.clip(rel[:, :S0, S0:], 1, REL_K) - 1
    oh = jax.nn.one_hot(rel, REL_K, dtype=jnp.float32)
    rel_energy = jnp.einsum('nijh,nih->nij', oh, qh)
    mask = attention_mask[:, :S0, S0:].astype(bool)
    logits = jnp.where(mask, (energy + rel_energy) / scaling, -9999.0)
    attn = jax.nn.softmax(logits, axis=-1)
    v_ = jnp.einsum('nij,njk->nik', attn, v)
    out0 = (u * v_) @ params['w_out'] + params['b_out']
    gates = jax.nn.sigmoid(
        jnp.concatenate([out0, res[:, :S0]], -1) @ params['w_gate'] + params['b_gate'])
    out_top = gates * out0 + (1.0 - gates) * res[:, :S0]
    return jnp.concatenate([out_top, res[:, S0:]], axis=1)


if __name__ == "__main__":
    N, S, D = 2, 9, 32          # hidden_size = 32, so d = min(128, 32) = 32
    d = min(128, D)

    key = jax.random.PRNGKey(0)
    k1, k2, k3, k4 = jax.random.split(key, 4)
    sequence = jax.random.normal(k1, (N, S, D), jnp.float32)
    attention_mask = jax.random.uniform(k2, (N, S, S)) > 0.3     # bool (N, S, S)
    heights = jax.random.randint(k3, (N, S), 0, 2 * REL_K).astype(jnp.int32)
    params = init_params(k4, D, d)

    out = pgau_pallas(params, sequence, attention_mask, heights)
    out = jax.block_until_ready(out)

    ref = pgau_ref(params, sequence, attention_mask, heights)
    assert out.shape == (N, S, D), out.shape
    # Tolerance accounts for bf16 MXU operands + approx softmax reciprocal.
    if not jnp.allclose(out, ref, atol=3e-3, rtol=3e-3):
        max_err = float(jnp.max(jnp.abs(out - ref)))
        raise AssertionError(f"Pallas output mismatch, max abs err = {max_err}")

    print("KERNEL_OK")
</pallas_src>

<mosaic_0001>
module attributes {stable_mosaic.version = 11 : i64} {
  func.func @pgau_kernel(%arg0: i32, %arg1: memref<1x4x32xf32, #tpu.memory_space<vmem>>, %arg2: memref<1x5x32xf32, #tpu.memory_space<vmem>>, %arg3: memref<1x4x5xi8, #tpu.memory_space<vmem>>, %arg4: memref<32x32xbf16, #tpu.memory_space<vmem>>, %arg5: memref<1x32xf32, #tpu.memory_space<vmem>>, %arg6: memref<1x32xf32, #tpu.memory_space<vmem>>, %arg7: memref<1x32xf32, #tpu.memory_space<vmem>>, %arg8: memref<32x64xbf16, #tpu.memory_space<vmem>>, %arg9: memref<1x64xf32, #tpu.memory_space<vmem>>, %arg10: memref<32x32xbf16, #tpu.memory_space<vmem>>, %arg11: memref<1x32xf32, #tpu.memory_space<vmem>>, %arg12: memref<32x64xbf16, #tpu.memory_space<vmem>>, %arg13: memref<1x64xf32, #tpu.memory_space<vmem>>, %arg14: memref<3x32xf32, #tpu.memory_space<vmem>>, %arg15: memref<3x32xf32, #tpu.memory_space<vmem>>, %arg16: memref<10x32xf32, #tpu.memory_space<vmem>>, %arg17: memref<64x32xbf16, #tpu.memory_space<vmem>>, %arg18: memref<1x32xf32, #tpu.memory_space<vmem>>, %arg19: memref<32x32xbf16, #tpu.memory_space<vmem>>, %arg20: memref<32x32xbf16, #tpu.memory_space<vmem>>, %arg21: memref<1x32xf32, #tpu.memory_space<vmem>>, %arg22: memref<1x4x32xf32, #tpu.memory_space<vmem>>) attributes {dimension_semantics = [#tpu.dimension_semantics<parallel>], iteration_bounds = array<i64: 2>, scalar_prefetch = 0 : i64, scratch_operands = 0 : i64, tpu.core_type = #tpu.core_type<tc>, window_params = [{transform_indices = @transform_0, window_bounds = array<i64: 1, 4, 32>}, {transform_indices = @transform_1, window_bounds = array<i64: 1, 5, 32>}, {transform_indices = @transform_2, window_bounds = array<i64: 1, 4, 5>}, {pipeline_mode = #tpu.pipeline_mode<synchronous>, transform_indices = @transform_3, window_bounds = array<i64: 32, 32>}, {pipeline_mode = #tpu.pipeline_mode<synchronous>, transform_indices = @transform_4, window_bounds = array<i64: 1, 32>}, {pipeline_mode = #tpu.pipeline_mode<synchronous>, transform_indices = @transform_5, window_bounds = array<i64: 1, 32>}, {pipeline_mode = #tpu.pipeline_mode<synchronous>, transform_indices = @transform_6, window_bounds = array<i64: 1, 32>}, {pipeline_mode = #tpu.pipeline_mode<synchronous>, transform_indices = @transform_7, window_bounds = array<i64: 32, 64>}, {pipeline_mode = #tpu.pipeline_mode<synchronous>, transform_indices = @transform_8, window_bounds = array<i64: 1, 64>}, {pipeline_mode = #tpu.pipeline_mode<synchronous>, transform_indices = @transform_9, window_bounds = array<i64: 32, 32>}, {pipeline_mode = #tpu.pipeline_mode<synchronous>, transform_indices = @transform_10, window_bounds = array<i64: 1, 32>}, {pipeline_mode = #tpu.pipeline_mode<synchronous>, transform_indices = @transform_11, window_bounds = array<i64: 32, 64>}, {pipeline_mode = #tpu.pipeline_mode<synchronous>, transform_indices = @transform_12, window_bounds = array<i64: 1, 64>}, {pipeline_mode = #tpu.pipeline_mode<synchronous>, transform_indices = @transform_13, window_bounds = array<i64: 3, 32>}, {pipeline_mode = #tpu.pipeline_mode<synchronous>, transform_indices = @transform_14, window_bounds = array<i64: 3, 32>}, {pipeline_mode = #tpu.pipeline_mode<synchronous>, transform_indices = @transform_15, window_bounds = array<i64: 10, 32>}, {pipeline_mode = #tpu.pipeline_mode<synchronous>, transform_indices = @transform_16, window_bounds = array<i64: 64, 32>}, {pipeline_mode = #tpu.pipeline_mode<synchronous>, transform_indices = @transform_17, window_bounds = array<i64: 1, 32>}, {pipeline_mode = #tpu.pipeline_mode<synchronous>, transform_indices = @transform_18, window_bounds = array<i64: 32, 32>}, {pipeline_mode = #tpu.pipeline_mode<synchronous>, transform_indices = @transform_19, window_bounds = array<i64: 32, 32>}, {pipeline_mode = #tpu.pipeline_mode<synchronous>, transform_indices = @transform_20, window_bounds = array<i64: 1, 32>}, {transform_indices = @transform_21, window_bounds = array<i64: 1, 4, 32>}]} {
    %c0 = arith.constant 0 : index
    %c0_0 = arith.constant 0 : index
    %c0_1 = arith.constant 0 : index
    %0 = vector.load %arg1[%c0, %c0_0, %c0_1] : memref<1x4x32xf32, #tpu.memory_space<vmem>>, vector<1x4x32xf32>
    %c0_2 = arith.constant 0 : index
    %c0_3 = arith.constant 0 : index
    %c0_4 = arith.constant 0 : index
    %1 = vector.load %arg2[%c0_2, %c0_3, %c0_4] : memref<1x5x32xf32, #tpu.memory_space<vmem>>, vector<1x5x32xf32>
    %2 = vector.shape_cast %0 : vector<1x4x32xf32> to vector<4x32xf32>
    %3 = vector.shape_cast %1 : vector<1x5x32xf32> to vector<5x32xf32>
    %4 = arith.truncf %2 : vector<4x32xf32> to vector<4x32xbf16>
    %c0_5 = arith.constant 0 : index
    %c0_6 = arith.constant 0 : index
    %5 = vector.load %arg4[%c0_5, %c0_6] : memref<32x32xbf16, #tpu.memory_space<vmem>>, vector<32x32xbf16>
    %cst = arith.constant dense<0.000000e+00> : vector<4x32xf32>
    %6 = tpu.matmul %4, %5, %cst {dimension_numbers = #tpu.dot_dimension_numbers<[1], [0], [0], [1], [0, 0, 1, 1], [], []>} : vector<4x32xbf16>, vector<32x32xbf16>, vector<4x32xf32> -> vector<4x32xf32>
    %c0_7 = arith.constant 0 : index
    %c0_8 = arith.constant 0 : index
    %7 = vector.load %arg5[%c0_7, %c0_8] : memref<1x32xf32, #tpu.memory_space<vmem>>, vector<1x32xf32>
    %8 = vector.broadcast %7 : vector<1x32xf32> to vector<4x32xf32>
    %9 = arith.addf %6, %8 : vector<4x32xf32>
    %cst_9 = arith.constant dense<0.000000e+00> : vector<4xf32>
    %10 = vector.multi_reduction <add>, %9, %cst_9 [1] : vector<4x32xf32> to vector<4xf32>
    %11 = vector.shape_cast %10 : vector<4xf32> to vector<4x1xf32>
    %cst_10 = arith.constant 3.200000e+01 : f32
    %12 = vector.broadcast %cst_10 : f32 to vector<4x1xf32>
    %13 = arith.divf %11, %12 : vector<4x1xf32>
    %14 = vector.broadcast %13 : vector<4x1xf32> to vector<4x32xf32>
    %15 = arith.subf %9, %14 : vector<4x32xf32>
    %16 = arith.mulf %15, %15 : vector<4x32xf32>
    %cst_11 = arith.constant dense<0.000000e+00> : vector<4xf32>
    %17 = vector.multi_reduction <add>, %16, %cst_11 [1] : vector<4x32xf32> to vector<4xf32>
    %18 = vector.shape_cast %17 : vector<4xf32> to vector<4x1xf32>
    %cst_12 = arith.constant 3.200000e+01 : f32
    %19 = vector.broadcast %cst_12 : f32 to vector<4x1xf32>
    %20 = arith.divf %18, %19 : vector<4x1xf32>
    %21 = vector.broadcast %13 : vector<4x1xf32> to vector<4x32xf32>
    %22 = arith.subf %9, %21 : vector<4x32xf32>
    %cst_13 = arith.constant 9.99999974E-6 : f32
    %23 = vector.broadcast %cst_13 : f32 to vector<4x1xf32>
    %24 = arith.addf %20, %23 : vector<4x1xf32>
    %25 = math.rsqrt %24 : vector<4x1xf32>
    %26 = vector.broadcast %25 : vector<4x1xf32> to vector<4x32xf32>
    %27 = arith.mulf %22, %26 : vector<4x32xf32>
    %c0_14 = arith.constant 0 : index
    %c0_15 = arith.constant 0 : index
    %28 = vector.load %arg6[%c0_14, %c0_15] : memref<1x32xf32, #tpu.memory_space<vmem>>, vector<1x32xf32>
    %29 = vector.broadcast %28 : vector<1x32xf32> to vector<4x32xf32>
    %30 = arith.mulf %27, %29 : vector<4x32xf32>
    %c0_16 = arith.constant 0 : index
    %c0_17 = arith.constant 0 : index
    %31 = vector.load %arg7[%c0_16, %c0_17] : memref<1x32xf32, #tpu.memory_space<vmem>>, vector<1x32xf32>
    %32 = vector.broadcast %31 : vector<1x32xf32> to vector<4x32xf32>
    %33 = arith.addf %30, %32 : vector<4x32xf32>
    %34 = arith.truncf %3 : vector<5x32xf32> to vector<5x32xbf16>
    %c0_18 = arith.constant 0 : index
    %c0_19 = arith.constant 0 : index
    %35 = vector.load %arg4[%c0_18, %c0_19] : memref<32x32xbf16, #tpu.memory_space<vmem>>, vector<32x32xbf16>
    %cst_20 = arith.constant dense<0.000000e+00> : vector<5x32xf32>
    %36 = tpu.matmul %34, %35, %cst_20 {dimension_numbers = #tpu.dot_dimension_numbers<[1], [0], [0], [1], [0, 0, 1, 1], [], []>} : vector<5x32xbf16>, vector<32x32xbf16>, vector<5x32xf32> -> vector<5x32xf32>
    %c0_21 = arith.constant 0 : index
    %c0_22 = arith.constant 0 : index
    %37 = vector.load %arg5[%c0_21, %c0_22] : memref<1x32xf32, #tpu.memory_space<vmem>>, vector<1x32xf32>
    %38 = vector.broadcast %37 : vector<1x32xf32> to vector<5x32xf32>
    %39 = arith.addf %36, %38 : vector<5x32xf32>
    %cst_23 = arith.constant dense<0.000000e+00> : vector<5xf32>
    %40 = vector.multi_reduction <add>, %39, %cst_23 [1] : vector<5x32xf32> to vector<5xf32>
    %41 = vector.shape_cast %40 : vector<5xf32> to vector<5x1xf32>
    %cst_24 = arith.constant 3.200000e+01 : f32
    %42 = vector.broadcast %cst_24 : f32 to vector<5x1xf32>
    %43 = arith.divf %41, %42 : vector<5x1xf32>
    %44 = vector.broadcast %43 : vector<5x1xf32> to vector<5x32xf32>
    %45 = arith.subf %39, %44 : vector<5x32xf32>
    %46 = arith.mulf %45, %45 : vector<5x32xf32>
    %cst_25 = arith.constant dense<0.000000e+00> : vector<5xf32>
    %47 = vector.multi_reduction <add>, %46, %cst_25 [1] : vector<5x32xf32> to vector<5xf32>
    %48 = vector.shape_cast %47 : vector<5xf32> to vector<5x1xf32>
    %cst_26 = arith.constant 3.200000e+01 : f32
    %49 = vector.broadcast %cst_26 : f32 to vector<5x1xf32>
    %50 = arith.divf %48, %49 : vector<5x1xf32>
    %51 = vector.broadcast %43 : vector<5x1xf32> to vector<5x32xf32>
    %52 = arith.subf %39, %51 : vector<5x32xf32>
    %cst_27 = arith.constant 9.99999974E-6 : f32
    %53 = vector.broadcast %cst_27 : f32 to vector<5x1xf32>
    %54 = arith.addf %50, %53 : vector<5x1xf32>
    %55 = math.rsqrt %54 : vector<5x1xf32>
    %56 = vector.broadcast %55 : vector<5x1xf32> to vector<5x32xf32>
    %57 = arith.mulf %52, %56 : vector<5x32xf32>
    %c0_28 = arith.constant 0 : index
    %c0_29 = arith.constant 0 : index
    %58 = vector.load %arg6[%c0_28, %c0_29] : memref<1x32xf32, #tpu.memory_space<vmem>>, vector<1x32xf32>
    %59 = vector.broadcast %58 : vector<1x32xf32> to vector<5x32xf32>
    %60 = arith.mulf %57, %59 : vector<5x32xf32>
    %c0_30 = arith.constant 0 : index
    %c0_31 = arith.constant 0 : index
    %61 = vector.load %arg7[%c0_30, %c0_31] : memref<1x32xf32, #tpu.memory_space<vmem>>, vector<1x32xf32>
    %62 = vector.broadcast %61 : vector<1x32xf32> to vector<5x32xf32>
    %63 = arith.addf %60, %62 : vector<5x32xf32>
    %64 = arith.truncf %33 : vector<4x32xf32> to vector<4x32xbf16>
    %65 = arith.truncf %63 : vector<5x32xf32> to vector<5x32xbf16>
    %c0_32 = arith.constant 0 : index
    %c0_33 = arith.constant 0 : index
    %66 = vector.load %arg8[%c0_32, %c0_33] : memref<32x64xbf16, #tpu.memory_space<vmem>>, vector<32x64xbf16>
    %cst_34 = arith.constant dense<0.000000e+00> : vector<4x64xf32>
    %67 = tpu.matmul %64, %66, %cst_34 {dimension_numbers = #tpu.dot_dimension_numbers<[1], [0], [0], [1], [0, 0, 1, 1], [], []>} : vector<4x32xbf16>, vector<32x64xbf16>, vector<4x64xf32> -> vector<4x64xf32>
    %c0_35 = arith.constant 0 : index
    %c0_36 = arith.constant 0 : index
    %68 = vector.load %arg9[%c0_35, %c0_36] : memref<1x64xf32, #tpu.memory_space<vmem>>, vector<1x64xf32>
    %69 = vector.broadcast %68 : vector<1x64xf32> to vector<4x64xf32>
    %70 = arith.addf %67, %69 : vector<4x64xf32>
    %71 = arith.negf %70 : vector<4x64xf32>
    %72 = math.exp %71 : vector<4x64xf32>
    %cst_37 = arith.constant 1.000000e+00 : f32
    %73 = vector.broadcast %cst_37 : f32 to vector<4x64xf32>
    %74 = arith.addf %73, %72 : vector<4x64xf32>
    %75 = arith.divf %73, %74 : vector<4x64xf32>
    %76 = arith.mulf %70, %75 : vector<4x64xf32>
    %c0_38 = arith.constant 0 : index
    %c0_39 = arith.constant 0 : index
    %77 = vector.load %arg10[%c0_38, %c0_39] : memref<32x32xbf16, #tpu.memory_space<vmem>>, vector<32x32xbf16>
    %cst_40 = arith.constant dense<0.000000e+00> : vector<4x32xf32>
    %78 = tpu.matmul %64, %77, %cst_40 {dimension_numbers = #tpu.dot_dimension_numbers<[1], [0], [0], [1], [0, 0, 1, 1], [], []>} : vector<4x32xbf16>, vector<32x32xbf16>, vector<4x32xf32> -> vector<4x32xf32>
    %c0_41 = arith.constant 0 : index
    %c0_42 = arith.constant 0 : index
    %79 = vector.load %arg11[%c0_41, %c0_42] : memref<1x32xf32, #tpu.memory_space<vmem>>, vector<1x32xf32>
    %80 = vector.broadcast %79 : vector<1x32xf32> to vector<4x32xf32>
    %81 = arith.addf %78, %80 : vector<4x32xf32>
    %82 = arith.negf %81 : vector<4x32xf32>
    %83 = math.exp %82 : vector<4x32xf32>
    %cst_43 = arith.constant 1.000000e+00 : f32
    %84 = vector.broadcast %cst_43 : f32 to vector<4x32xf32>
    %85 = arith.addf %84, %83 : vector<4x32xf32>
    %86 = arith.divf %84, %85 : vector<4x32xf32>
    %87 = arith.mulf %81, %86 : vector<4x32xf32>
    %c0_44 = arith.constant 0 : index
    %c0_45 = arith.constant 0 : index
    %88 = vector.load %arg10[%c0_44, %c0_45] : memref<32x32xbf16, #tpu.memory_space<vmem>>, vector<32x32xbf16>
    %cst_46 = arith.constant dense<0.000000e+00> : vector<5x32xf32>
    %89 = tpu.matmul %65, %88, %cst_46 {dimension_numbers = #tpu.dot_dimension_numbers<[1], [0], [0], [1], [0, 0, 1, 1], [], []>} : vector<5x32xbf16>, vector<32x32xbf16>, vector<5x32xf32> -> vector<5x32xf32>
    %c0_47 = arith.constant 0 : index
    %c0_48 = arith.constant 0 : index
    %90 = vector.load %arg11[%c0_47, %c0_48] : memref<1x32xf32, #tpu.memory_space<vmem>>, vector<1x32xf32>
    %91 = vector.broadcast %90 : vector<1x32xf32> to vector<5x32xf32>
    %92 = arith.addf %89, %91 : vector<5x32xf32>
    %93 = arith.negf %92 : vector<5x32xf32>
    %94 = math.exp %93 : vector<5x32xf32>
    %cst_49 = arith.constant 1.000000e+00 : f32
    %95 = vector.broadcast %cst_49 : f32 to vector<5x32xf32>
    %96 = arith.addf %95, %94 : vector<5x32xf32>
    %97 = arith.divf %95, %96 : vector<5x32xf32>
    %98 = arith.mulf %92, %97 : vector<5x32xf32>
    %c0_50 = arith.constant 0 : index
    %c0_51 = arith.constant 0 : index
    %99 = vector.load %arg12[%c0_50, %c0_51] : memref<32x64xbf16, #tpu.memory_space<vmem>>, vector<32x64xbf16>
    %cst_52 = arith.constant dense<0.000000e+00> : vector<5x64xf32>
    %100 = tpu.matmul %65, %99, %cst_52 {dimension_numbers = #tpu.dot_dimension_numbers<[1], [0], [0], [1], [0, 0, 1, 1], [], []>} : vector<5x32xbf16>, vector<32x64xbf16>, vector<5x64xf32> -> vector<5x64xf32>
    %c0_53 = arith.constant 0 : index
    %c0_54 = arith.constant 0 : index
    %101 = vector.load %arg13[%c0_53, %c0_54] : memref<1x64xf32, #tpu.memory_space<vmem>>, vector<1x64xf32>
    %102 = vector.broadcast %101 : vector<1x64xf32> to vector<5x64xf32>
    %103 = arith.addf %100, %102 : vector<5x64xf32>
    %104 = arith.negf %103 : vector<5x64xf32>
    %105 = math.exp %104 : vector<5x64xf32>
    %cst_55 = arith.constant 1.000000e+00 : f32
    %106 = vector.broadcast %cst_55 : f32 to vector<5x64xf32>
    %107 = arith.addf %106, %105 : vector<5x64xf32>
    %108 = arith.divf %106, %107 : vector<5x64xf32>
    %109 = arith.mulf %103, %108 : vector<5x64xf32>
    %c0_56 = arith.constant 0 : index
    %c0_57 = arith.constant 0 : index
    %110 = vector.load %arg14[%c0_56, %c0_57] : memref<3x32xf32, #tpu.memory_space<vmem>>, vector<3x32xf32>
    %c0_58 = arith.constant 0 : index
    %c0_59 = arith.constant 0 : index
    %111 = vector.load %arg15[%c0_58, %c0_59] : memref<3x32xf32, #tpu.memory_space<vmem>>, vector<3x32xf32>
    %112 = vector.extract_strided_slice %110 {offsets = [0, 0], sizes = [1, 32], strides = [1, 1]} : vector<3x32xf32> to vector<1x32xf32>
    %113 = vector.broadcast %112 : vector<1x32xf32> to vector<4x32xf32>
    %114 = arith.mulf %87, %113 : vector<4x32xf32>
    %115 = vector.extract_strided_slice %111 {offsets = [0, 0], sizes = [1, 32], strides = [1, 1]} : vector<3x32xf32> to vector<1x32xf32>
    %116 = vector.broadcast %115 : vector<1x32xf32> to vector<4x32xf32>
    %117 = arith.addf %114, %116 : vector<4x32xf32>
    %118 = vector.extract_strided_slice %110 {offsets = [1, 0], sizes = [1, 32], strides = [1, 1]} : vector<3x32xf32> to vector<1x32xf32>
    %119 = vector.broadcast %118 : vector<1x32xf32> to vector<4x32xf32>
    %120 = arith.mulf %87, %119 : vector<4x32xf32>
    %121 = vector.extract_strided_slice %111 {offsets = [1, 0], sizes = [1, 32], strides = [1, 1]} : vector<3x32xf32> to vector<1x32xf32>
    %122 = vector.broadcast %121 : vector<1x32xf32> to vector<4x32xf32>
    %123 = arith.addf %120, %122 : vector<4x32xf32>
    %124 = vector.extract_strided_slice %110 {offsets = [2, 0], sizes = [1, 32], strides = [1, 1]} : vector<3x32xf32> to vector<1x32xf32>
    %125 = vector.broadcast %124 : vector<1x32xf32> to vector<5x32xf32>
    %126 = arith.mulf %98, %125 : vector<5x32xf32>
    %127 = vector.extract_strided_slice %111 {offsets = [2, 0], sizes = [1, 32], strides = [1, 1]} : vector<3x32xf32> to vector<1x32xf32>
    %128 = vector.broadcast %127 : vector<1x32xf32> to vector<5x32xf32>
    %129 = arith.addf %126, %128 : vector<5x32xf32>
    %c0_60 = arith.constant 0 : index
    %c0_61 = arith.constant 0 : index
    %130 = vector.load %arg16[%c0_60, %c0_61] : memref<10x32xf32, #tpu.memory_space<vmem>>, vector<10x32xf32>
    %cst_62 = arith.constant dense<0.000000e+00> : vector<4x10xf32>
    %131 = tpu.matmul %123, %130, %cst_62 {dimension_numbers = #tpu.dot_dimension_numbers<[1], [1], [0], [0], [0, 0, 1, 0], [], []>} : vector<4x32xf32>, vector<10x32xf32>, vector<4x10xf32> -> vector<4x10xf32>
    %132 = vector.shape_cast %117 : vector<4x32xf32> to vector<1x4x32xf32>
    %133 = vector.shape_cast %129 : vector<5x32xf32> to vector<1x5x32xf32>
    %134 = vector.shape_cast %131 : vector<4x10xf32> to vector<1x4x10xf32>
    "tpu.trace_start"() <{level = 10 : i32, message = "bqd,bkd->bqk"}> : () -> ()
    %cst_63 = arith.constant dense<0.000000e+00> : vector<1x4x5xf32>
    %135 = tpu.matmul %132, %133, %cst_63 {dimension_numbers = #tpu.dot_dimension_numbers<[2], [2], [1], [1], [0, 0, 0, 1, 1, 1], [0], [0]>} : vector<1x4x32xf32>, vector<1x5x32xf32>, vector<1x4x5xf32> -> vector<1x4x5xf32>
    "tpu.trace_stop"() : () -> ()
    %c0_64 = arith.constant 0 : index
    %c0_65 = arith.constant 0 : index
    %c0_66 = arith.constant 0 : index
    %136 = vector.load %arg3[%c0_64, %c0_65, %c0_66] : memref<1x4x5xi8, #tpu.memory_space<vmem>>, vector<1x4x5xi8>
    %137 = arith.extsi %136 : vector<1x4x5xi8> to vector<1x4x5xi32>
    %138 = vector.extract_strided_slice %134 {offsets = [0, 0, 0], sizes = [1, 4, 1], strides = [1, 1, 1]} : vector<1x4x10xf32> to vector<1x4x1xf32>
    %139 = vector.shape_cast %138 : vector<1x4x1xf32> to vector<1x4x1xf32>
    %140 = vector.broadcast %139 : vector<1x4x1xf32> to vector<1x4x5xf32>
    %c1_i32 = arith.constant 1 : i32
    %141 = vector.broadcast %c1_i32 : i32 to vector<1x4x5xi32>
    %142 = arith.cmpi eq, %137, %141 : vector<1x4x5xi32>
    %143 = vector.extract_strided_slice %134 {offsets = [0, 0, 1], sizes = [1, 4, 1], strides = [1, 1, 1]} : vector<1x4x10xf32> to vector<1x4x1xf32>
    %144 = vector.shape_cast %143 : vector<1x4x1xf32> to vector<1x4x1xf32>
    %145 = vector.broadcast %144 : vector<1x4x1xf32> to vector<1x4x5xf32>
    %146 = arith.select %142, %145, %140 : vector<1x4x5xi1>, vector<1x4x5xf32>
    %c2_i32 = arith.constant 2 : i32
    %147 = vector.broadcast %c2_i32 : i32 to vector<1x4x5xi32>
    %148 = arith.cmpi eq, %137, %147 : vector<1x4x5xi32>
    %149 = vector.extract_strided_slice %134 {offsets = [0, 0, 2], sizes = [1, 4, 1], strides = [1, 1, 1]} : vector<1x4x10xf32> to vector<1x4x1xf32>
    %150 = vector.shape_cast %149 : vector<1x4x1xf32> to vector<1x4x1xf32>
    %151 = vector.broadcast %150 : vector<1x4x1xf32> to vector<1x4x5xf32>
    %152 = arith.select %148, %151, %146 : vector<1x4x5xi1>, vector<1x4x5xf32>
    %c3_i32 = arith.constant 3 : i32
    %153 = vector.broadcast %c3_i32 : i32 to vector<1x4x5xi32>
    %154 = arith.cmpi eq, %137, %153 : vector<1x4x5xi32>
    %155 = vector.extract_strided_slice %134 {offsets = [0, 0, 3], sizes = [1, 4, 1], strides = [1, 1, 1]} : vector<1x4x10xf32> to vector<1x4x1xf32>
    %156 = vector.shape_cast %155 : vector<1x4x1xf32> to vector<1x4x1xf32>
    %157 = vector.broadcast %156 : vector<1x4x1xf32> to vector<1x4x5xf32>
    %158 = arith.select %154, %157, %152 : vector<1x4x5xi1>, vector<1x4x5xf32>
    %c4_i32 = arith.constant 4 : i32
    %159 = vector.broadcast %c4_i32 : i32 to vector<1x4x5xi32>
    %160 = arith.cmpi eq, %137, %159 : vector<1x4x5xi32>
    %161 = vector.extract_strided_slice %134 {offsets = [0, 0, 4], sizes = [1, 4, 1], strides = [1, 1, 1]} : vector<1x4x10xf32> to vector<1x4x1xf32>
    %162 = vector.shape_cast %161 : vector<1x4x1xf32> to vector<1x4x1xf32>
    %163 = vector.broadcast %162 : vector<1x4x1xf32> to vector<1x4x5xf32>
    %164 = arith.select %160, %163, %158 : vector<1x4x5xi1>, vector<1x4x5xf32>
    %c5_i32 = arith.constant 5 : i32
    %165 = vector.broadcast %c5_i32 : i32 to vector<1x4x5xi32>
    %166 = arith.cmpi eq, %137, %165 : vector<1x4x5xi32>
    %167 = vector.extract_strided_slice %134 {offsets = [0, 0, 5], sizes = [1, 4, 1], strides = [1, 1, 1]} : vector<1x4x10xf32> to vector<1x4x1xf32>
    %168 = vector.shape_cast %167 : vector<1x4x1xf32> to vector<1x4x1xf32>
    %169 = vector.broadcast %168 : vector<1x4x1xf32> to vector<1x4x5xf32>
    %170 = arith.select %166, %169, %164 : vector<1x4x5xi1>, vector<1x4x5xf32>
    %c6_i32 = arith.constant 6 : i32
    %171 = vector.broadcast %c6_i32 : i32 to vector<1x4x5xi32>
    %172 = arith.cmpi eq, %137, %171 : vector<1x4x5xi32>
    %173 = vector.extract_strided_slice %134 {offsets = [0, 0, 6], sizes = [1, 4, 1], strides = [1, 1, 1]} : vector<1x4x10xf32> to vector<1x4x1xf32>
    %174 = vector.shape_cast %173 : vector<1x4x1xf32> to vector<1x4x1xf32>
    %175 = vector.broadcast %174 : vector<1x4x1xf32> to vector<1x4x5xf32>
    %176 = arith.select %172, %175, %170 : vector<1x4x5xi1>, vector<1x4x5xf32>
    %c7_i32 = arith.constant 7 : i32
    %177 = vector.broadcast %c7_i32 : i32 to vector<1x4x5xi32>
    %178 = arith.cmpi eq, %137, %177 : vector<1x4x5xi32>
    %179 = vector.extract_strided_slice %134 {offsets = [0, 0, 7], sizes = [1, 4, 1], strides = [1, 1, 1]} : vector<1x4x10xf32> to vector<1x4x1xf32>
    %180 = vector.shape_cast %179 : vector<1x4x1xf32> to vector<1x4x1xf32>
    %181 = vector.broadcast %180 : vector<1x4x1xf32> to vector<1x4x5xf32>
    %182 = arith.select %178, %181, %176 : vector<1x4x5xi1>, vector<1x4x5xf32>
    %c8_i32 = arith.constant 8 : i32
    %183 = vector.broadcast %c8_i32 : i32 to vector<1x4x5xi32>
    %184 = arith.cmpi eq, %137, %183 : vector<1x4x5xi32>
    %185 = vector.extract_strided_slice %134 {offsets = [0, 0, 8], sizes = [1, 4, 1], strides = [1, 1, 1]} : vector<1x4x10xf32> to vector<1x4x1xf32>
    %186 = vector.shape_cast %185 : vector<1x4x1xf32> to vector<1x4x1xf32>
    %187 = vector.broadcast %186 : vector<1x4x1xf32> to vector<1x4x5xf32>
    %188 = arith.select %184, %187, %182 : vector<1x4x5xi1>, vector<1x4x5xf32>
    %c9_i32 = arith.constant 9 : i32
    %189 = vector.broadcast %c9_i32 : i32 to vector<1x4x5xi32>
    %190 = arith.cmpi eq, %137, %189 : vector<1x4x5xi32>
    %191 = vector.extract_strided_slice %134 {offsets = [0, 0, 9], sizes = [1, 4, 1], strides = [1, 1, 1]} : vector<1x4x10xf32> to vector<1x4x1xf32>
    %192 = vector.shape_cast %191 : vector<1x4x1xf32> to vector<1x4x1xf32>
    %193 = vector.broadcast %192 : vector<1x4x1xf32> to vector<1x4x5xf32>
    %194 = arith.select %190, %193, %188 : vector<1x4x5xi1>, vector<1x4x5xf32>
    %195 = arith.addf %135, %194 : vector<1x4x5xf32>
    %cst_67 = arith.constant 1.250000e-01 : f32
    %196 = vector.broadcast %cst_67 : f32 to vector<1x4x5xf32>
    %197 = arith.mulf %195, %196 : vector<1x4x5xf32>
    %c0_i32 = arith.constant 0 : i32
    %198 = vector.broadcast %c0_i32 : i32 to vector<1x4x5xi32>
    %199 = arith.cmpi slt, %137, %198 : vector<1x4x5xi32>
    %cst_68 = arith.constant -9.999000e+03 : f32
    %200 = vector.broadcast %cst_68 : f32 to vector<1x4x5xf32>
    %201 = arith.select %199, %200, %197 : vector<1x4x5xi1>, vector<1x4x5xf32>
    %cst_69 = arith.constant dense<0xFF800000> : vector<1x4xf32>
    %202 = vector.multi_reduction <maximumf>, %201, %cst_69 [2] : vector<1x4x5xf32> to vector<1x4xf32>
    %203 = vector.shape_cast %202 : vector<1x4xf32> to vector<1x4x1xf32>
    %204 = vector.broadcast %203 : vector<1x4x1xf32> to vector<1x4x5xf32>
    %205 = arith.subf %201, %204 : vector<1x4x5xf32>
    %206 = math.exp %205 : vector<1x4x5xf32>
    %cst_70 = arith.constant dense<0.000000e+00> : vector<1x4xf32>
    %207 = vector.multi_reduction <add>, %206, %cst_70 [2] : vector<1x4x5xf32> to vector<1x4xf32>
    %208 = vector.shape_cast %207 : vector<1x4xf32> to vector<1x4x1xf32>
    %209 = tpu.reciprocal %208 {approx = true} : vector<1x4x1xf32> -> vector<1x4x1xf32>
    %210 = vector.broadcast %209 : vector<1x4x1xf32> to vector<1x4x5xf32>
    %211 = arith.mulf %206, %210 : vector<1x4x5xf32>
    %212 = vector.shape_cast %109 : vector<5x64xf32> to vector<1x5x64xf32>
    %213 = arith.truncf %211 : vector<1x4x5xf32> to vector<1x4x5xbf16>
    %214 = arith.truncf %212 : vector<1x5x64xf32> to vector<1x5x64xbf16>
    "tpu.trace_start"() <{level = 10 : i32, message = "bqk,bkd->bqd"}> : () -> ()
    %cst_71 = arith.constant dense<0.000000e+00> : vector<1x4x64xf32>
    %215 = tpu.matmul %213, %214, %cst_71 {dimension_numbers = #tpu.dot_dimension_numbers<[2], [1], [1], [2], [0, 0, 0, 1, 1, 2], [0], [0]>} : vector<1x4x5xbf16>, vector<1x5x64xbf16>, vector<1x4x64xf32> -> vector<1x4x64xf32>
    "tpu.trace_stop"() : () -> ()
    %216 = vector.shape_cast %76 : vector<4x64xf32> to vector<1x4x64xf32>
    %217 = arith.mulf %216, %215 : vector<1x4x64xf32>
    %218 = vector.shape_cast %217 : vector<1x4x64xf32> to vector<4x64xf32>
    %219 = arith.truncf %218 : vector<4x64xf32> to vector<4x64xbf16>
    %c0_72 = arith.constant 0 : index
    %c0_73 = arith.constant 0 : index
    %220 = vector.load %arg17[%c0_72, %c0_73] : memref<64x32xbf16, #tpu.memory_space<vmem>>, vector<64x32xbf16>
    %cst_74 = arith.constant dense<0.000000e+00> : vector<4x32xf32>
    %221 = tpu.matmul %219, %220, %cst_74 {dimension_numbers = #tpu.dot_dimension_numbers<[1], [0], [0], [1], [0, 0, 1, 1], [], []>} : vector<4x64xbf16>, vector<64x32xbf16>, vector<4x32xf32> -> vector<4x32xf32>
    %c0_75 = arith.constant 0 : index
    %c0_76 = arith.constant 0 : index
    %222 = vector.load %arg18[%c0_75, %c0_76] : memref<1x32xf32, #tpu.memory_space<vmem>>, vector<1x32xf32>
    %223 = vector.broadcast %222 : vector<1x32xf32> to vector<4x32xf32>
    %224 = arith.addf %221, %223 : vector<4x32xf32>
    %225 = arith.truncf %224 : vector<4x32xf32> to vector<4x32xbf16>
    %c0_77 = arith.constant 0 : index
    %c0_78 = arith.constant 0 : index
    %226 = vector.load %arg19[%c0_77, %c0_78] : memref<32x32xbf16, #tpu.memory_space<vmem>>, vector<32x32xbf16>
    %cst_79 = arith.constant dense<0.000000e+00> : vector<4x32xf32>
    %227 = tpu.matmul %225, %226, %cst_79 {dimension_numbers = #tpu.dot_dimension_numbers<[1], [0], [0], [1], [0, 0, 1, 1], [], []>} : vector<4x32xbf16>, vector<32x32xbf16>, vector<4x32xf32> -> vector<4x32xf32>
    %228 = arith.truncf %2 : vector<4x32xf32> to vector<4x32xbf16>
    %c0_80 = arith.constant 0 : index
    %c0_81 = arith.constant 0 : index
    %229 = vector.load %arg20[%c0_80, %c0_81] : memref<32x32xbf16, #tpu.memory_space<vmem>>, vector<32x32xbf16>
    %cst_82 = arith.constant dense<0.000000e+00> : vector<4x32xf32>
    %230 = tpu.matmul %228, %229, %cst_82 {dimension_numbers = #tpu.dot_dimension_numbers<[1], [0], [0], [1], [0, 0, 1, 1], [], []>} : vector<4x32xbf16>, vector<32x32xbf16>, vector<4x32xf32> -> vector<4x32xf32>
    %231 = arith.addf %227, %230 : vector<4x32xf32>
    %c0_83 = arith.constant 0 : index
    %c0_84 = arith.constant 0 : index
    %232 = vector.load %arg21[%c0_83, %c0_84] : memref<1x32xf32, #tpu.memory_space<vmem>>, vector<1x32xf32>
    %233 = vector.broadcast %232 : vector<1x32xf32> to vector<4x32xf32>
    %234 = arith.addf %231, %233 : vector<4x32xf32>
    %235 = arith.negf %234 : vector<4x32xf32>
    %236 = math.exp %235 : vector<4x32xf32>
    %cst_85 = arith.constant 1.000000e+00 : f32
    %237 = vector.broadcast %cst_85 : f32 to vector<4x32xf32>
    %238 = arith.addf %237, %236 : vector<4x32xf32>
    %239 = arith.divf %237, %238 : vector<4x32xf32>
    %240 = arith.mulf %239, %224 : vector<4x32xf32>
    %cst_86 = arith.constant 1.000000e+00 : f32
    %241 = vector.broadcast %cst_86 : f32 to vector<4x32xf32>
    %242 = arith.subf %241, %239 : vector<4x32xf32>
    %243 = arith.mulf %242, %2 : vector<4x32xf32>
    %244 = arith.addf %240, %243 : vector<4x32xf32>
    %245 = vector.shape_cast %244 : vector<4x32xf32> to vector<1x4x32xf32>
    %c0_87 = arith.constant 0 : index
    %c0_88 = arith.constant 0 : index
    %c0_89 = arith.constant 0 : index
    %246 = vector.load %arg22[%c0_87, %c0_88, %c0_89] : memref<1x4x32xf32, #tpu.memory_space<vmem>>, vector<1x4x32xf32>
    tpu.vector_store %arg22[%c0_87, %c0_88, %c0_89], %245 {strides = array<i32>} : memref<1x4x32xf32, #tpu.memory_space<vmem>>, vector<1x4x32xf32>,
    return
  }
  func.func @transform_0(%arg0: i32) -> (i32, i32, i32) {
    %c0_i32 = arith.constant 0 : i32
    %c0_i32_0 = arith.constant 0 : i32
    %c0_i32_1 = arith.constant 0 : i32
    return %arg0, %c0_i32, %c0_i32_0 : i32, i32, i32
  }
  func.func @transform_1(%arg0: i32) -> (i32, i32, i32) {
    %c0_i32 = arith.constant 0 : i32
    %c0_i32_0 = arith.constant 0 : i32
    %c0_i32_1 = arith.constant 0 : i32
    return %arg0, %c0_i32, %c0_i32_0 : i32, i32, i32
  }
  func.func @transform_2(%arg0: i32) -> (i32, i32, i32) {
    %c0_i32 = arith.constant 0 : i32
    %c0_i32_0 = arith.constant 0 : i32
    %c0_i32_1 = arith.constant 0 : i32
    return %arg0, %c0_i32, %c0_i32_0 : i32, i32, i32
  }
  func.func @transform_3(%arg0: i32) -> (i32, i32) {
    %c0_i32 = arith.constant 0 : i32
    %c0_i32_0 = arith.constant 0 : i32
    %c0_i32_1 = arith.constant 0 : i32
    return %c0_i32, %c0_i32_0 : i32, i32
  }
  func.func @transform_4(%arg0: i32) -> (i32, i32) {
    %c0_i32 = arith.constant 0 : i32
    %c0_i32_0 = arith.constant 0 : i32
    %c0_i32_1 = arith.constant 0 : i32
    return %c0_i32, %c0_i32_0 : i32, i32
  }
  func.func @transform_5(%arg0: i32) -> (i32, i32) {
    %c0_i32 = arith.constant 0 : i32
    %c0_i32_0 = arith.constant 0 : i32
    %c0_i32_1 = arith.constant 0 : i32
    return %c0_i32, %c0_i32_0 : i32, i32
  }
  func.func @transform_6(%arg0: i32) -> (i32, i32) {
    %c0_i32 = arith.constant 0 : i32
    %c0_i32_0 = arith.constant 0 : i32
    %c0_i32_1 = arith.constant 0 : i32
    return %c0_i32, %c0_i32_0 : i32, i32
  }
  func.func @transform_7(%arg0: i32) -> (i32, i32) {
    %c0_i32 = arith.constant 0 : i32
    %c0_i32_0 = arith.constant 0 : i32
    %c0_i32_1 = arith.constant 0 : i32
    return %c0_i32, %c0_i32_0 : i32, i32
  }
  func.func @transform_8(%arg0: i32) -> (i32, i32) {
    %c0_i32 = arith.constant 0 : i32
    %c0_i32_0 = arith.constant 0 : i32
    %c0_i32_1 = arith.constant 0 : i32
    return %c0_i32, %c0_i32_0 : i32, i32
  }
  func.func @transform_9(%arg0: i32) -> (i32, i32) {
    %c0_i32 = arith.constant 0 : i32
    %c0_i32_0 = arith.constant 0 : i32
    %c0_i32_1 = arith.constant 0 : i32
    return %c0_i32, %c0_i32_0 : i32, i32
  }
  func.func @transform_10(%arg0: i32) -> (i32, i32) {
    %c0_i32 = arith.constant 0 : i32
    %c0_i32_0 = arith.constant 0 : i32
    %c0_i32_1 = arith.constant 0 : i32
    return %c0_i32, %c0_i32_0 : i32, i32
  }
  func.func @transform_11(%arg0: i32) -> (i32, i32) {
    %c0_i32 = arith.constant 0 : i32
    %c0_i32_0 = arith.constant 0 : i32
    %c0_i32_1 = arith.constant 0 : i32
    return %c0_i32, %c0_i32_0 : i32, i32
  }
  func.func @transform_12(%arg0: i32) -> (i32, i32) {
    %c0_i32 = arith.constant 0 : i32
    %c0_i32_0 = arith.constant 0 : i32
    %c0_i32_1 = arith.constant 0 : i32
    return %c0_i32, %c0_i32_0 : i32, i32
  }
  func.func @transform_13(%arg0: i32) -> (i32, i32) {
    %c0_i32 = arith.constant 0 : i32
    %c0_i32_0 = arith.constant 0 : i32
    %c0_i32_1 = arith.constant 0 : i32
    return %c0_i32, %c0_i32_0 : i32, i32
  }
  func.func @transform_14(%arg0: i32) -> (i32, i32) {
    %c0_i32 = arith.constant 0 : i32
    %c0_i32_0 = arith.constant 0 : i32
    %c0_i32_1 = arith.constant 0 : i32
    return %c0_i32, %c0_i32_0 : i32, i32
  }
  func.func @transform_15(%arg0: i32) -> (i32, i32) {
    %c0_i32 = arith.constant 0 : i32
    %c0_i32_0 = arith.constant 0 : i32
    %c0_i32_1 = arith.constant 0 : i32
    return %c0_i32, %c0_i32_0 : i32, i32
  }
  func.func @transform_16(%arg0: i32) -> (i32, i32) {
    %c0_i32 = arith.constant 0 : i32
    %c0_i32_0 = arith.constant 0 : i32
    %c0_i32_1 = arith.constant 0 : i32
    return %c0_i32, %c0_i32_0 : i32, i32
  }
  func.func @transform_17(%arg0: i32) -> (i32, i32) {
    %c0_i32 = arith.constant 0 : i32
    %c0_i32_0 = arith.constant 0 : i32
    %c0_i32_1 = arith.constant 0 : i32
    return %c0_i32, %c0_i32_0 : i32, i32
  }
  func.func @transform_18(%arg0: i32) -> (i32, i32) {
    %c0_i32 = arith.constant 0 : i32
    %c0_i32_0 = arith.constant 0 : i32
    %c0_i32_1 = arith.constant 0 : i32
    return %c0_i32, %c0_i32_0 : i32, i32
  }
  func.func @transform_19(%arg0: i32) -> (i32, i32) {
    %c0_i32 = arith.constant 0 : i32
    %c0_i32_0 = arith.constant 0 : i32
    %c0_i32_1 = arith.constant 0 : i32
    return %c0_i32, %c0_i32_0 : i32, i32
  }
  func.func @transform_20(%arg0: i32) -> (i32, i32) {
    %c0_i32 = arith.constant 0 : i32
    %c0_i32_0 = arith.constant 0 : i32
    %c0_i32_1 = arith.constant 0 : i32
    return %c0_i32, %c0_i32_0 : i32, i32
  }
  func.func @transform_21(%arg0: i32) -> (i32, i32, i32) {
    %c0_i32 = arith.constant 0 : i32
    %c0_i32_0 = arith.constant 0 : i32
    %c0_i32_1 = arith.constant 0 : i32
    return %arg0, %c0_i32, %c0_i32_0 : i32, i32, i32
  }
}

</mosaic_0001>

<llo_original>
// kernel: tpu_custom_call.1
$region0: #{tpu_custom_call.1}
  #allocation0 [shape = 'u32[]', space=smem, size = 0x4, offset = 0x4, fixed_abs, tag = 'smem constant byte address 0x4 - core index']
  #allocation1 [shape = 'u32[144,128]{1,0:T(1,128)}', space=vmem, size = 0x12000, scoped, tag = 'internal scratch']
  %s0 = inlined_call_operand.hbm [shape: f32[2,4,32], index: 0, kind: input, shape index: {}]
  %s1 = inlined_call_operand.vmem [shape: f32[2,5,32], index: 1, kind: input, shape index: {}]
  %s2 = inlined_call_operand.hbm [shape: s8[2,4,5], index: 2, kind: input, shape index: {}]
  %s3 = inlined_call_operand.vmem [shape: bf16[32,32], index: 3, kind: input, shape index: {}]
  %s4 = inlined_call_operand.vmem [shape: f32[1,32], index: 4, kind: input, shape index: {}]
  %s5 = inlined_call_operand.hbm [shape: f32[1,32], index: 5, kind: input, shape index: {}]
  %s6 = inlined_call_operand.hbm [shape: f32[1,32], index: 6, kind: input, shape index: {}]
  %s7 = inlined_call_operand.vmem [shape: bf16[32,64], index: 7, kind: input, shape index: {}]
  %s8 = inlined_call_operand.hbm [shape: f32[1,64], index: 8, kind: input, shape index: {}]
  %s9 = inlined_call_operand.vmem [shape: bf16[32,32], index: 9, kind: input, shape index: {}]
  %s10 = inlined_call_operand.hbm [shape: f32[1,32], index: 10, kind: input, shape index: {}]
  %s11 = inlined_call_operand.vmem [shape: bf16[32,64], index: 11, kind: input, shape index: {}]
  %s12 = inlined_call_operand.hbm [shape: f32[1,64], index: 12, kind: input, shape index: {}]
  %s13 = inlined_call_operand.hbm [shape: f32[3,32], index: 13, kind: input, shape index: {}]
  %s14 = inlined_call_operand.hbm [shape: f32[3,32], index: 14, kind: input, shape index: {}]
  %s15 = inlined_call_operand.vmem [shape: f32[10,32], index: 15, kind: input, shape index: {}]
  %s16 = inlined_call_operand.vmem [shape: bf16[64,32], index: 16, kind: input, shape index: {}]
  %s17 = inlined_call_operand.vmem [shape: f32[1,32], index: 17, kind: input, shape index: {}]
  %s18 = inlined_call_operand.vmem [shape: bf16[32,32], index: 18, kind: input, shape index: {}]
  %s19 = inlined_call_operand.hbm [shape: bf16[32,32], index: 19, kind: input, shape index: {}]
  %s20 = inlined_call_operand.vmem [shape: f32[1,32], index: 20, kind: input, shape index: {}]
  %s21 = inlined_call_operand.hbm [shape: f32[2,4,32], index: 21, kind: output, shape index: {}]
  %s22 = sld [smem:[#allocation0]]
  $region157: #{tpu_custom_call.1} parent=0
    _
  %s24 = ssub.s32 1, %s22
  %s25 = scalar_select 0, %s24, %s22
  $region1: #{tpu_custom_call.1} parent=0
    #allocation2 [shape = 'u8[4096]{0}', space=vmem, size = 0x1000, scoped, tag = 'input window, operand 0']
    #allocation3 [shape = 's32[2]{0}', space=sflag, size = 0x8, scoped, tag = 'scoped memory for tpu_custom_call.1']
    #allocation4 [shape = 's32[2]{0}', space=sflag, size = 0x8, scoped, tag = 'scoped memory for tpu_custom_call.1']
    #allocation5 [shape = 'u8[1024]{0}', space=vmem, size = 0x400, scoped, tag = 'input window, operand 2']
    #allocation6 [shape = 's32[2]{0}', space=sflag, size = 0x8, scoped, tag = 'scoped memory for tpu_custom_call.1']
    #allocation7 [shape = 'u8[512]{0}', space=vmem, size = 0x400, scoped, tag = 'input window, operand 5, single buffered']
    #allocation8 [shape = 'u8[512]{0}', space=vmem, size = 0x400, scoped, tag = 'input window, operand 6, single buffered']
    #allocation9 [shape = 's32[1]{0}', space=sflag, size = 0x4, scoped, tag = 'scoped memory for tpu_custom_call.1']
    #allocation10 [shape = 'u8[512]{0}', space=vmem, size = 0x400, scoped, tag = 'input window, operand 8, single buffered']
    #allocation11 [shape = 'u8[512]{0}', space=vmem, size = 0x400, scoped, tag = 'input window, operand 10, single buffered']
    #allocation12 [shape = 's32[1]{0}', space=sflag, size = 0x4, scoped, tag = 'scoped memory for tpu_custom_call.1']
    #allocation13 [shape = 'u8[512]{0}', space=vmem, size = 0x400, scoped, tag = 'input window, operand 12, single buffered']
    #allocation14 [shape = 'u8[2048]{0}', space=vmem, size = 0x800, scoped, tag = 'input window, operand 13, single buffered']
    #allocation15 [shape = 's32[1]{0}', space=sflag, size = 0x4, scoped, tag = 'scoped memory for tpu_custom_call.1']
    #allocation16 [shape = 'u8[2048]{0}', space=vmem, size = 0x800, scoped, tag = 'input window, operand 14, single buffered']
    #allocation17 [shape = 'u8[8192]{0}', space=vmem, size = 0x2000, scoped, tag = 'input window, operand 19, single buffered']
    #allocation18 [shape = 's32[1]{0}', space=sflag, size = 0x4, scoped, tag = 'scoped memory for tpu_custom_call.1']
    #allocation19 [shape = 'u8[4096]{0}', space=vmem, size = 0x1000, scoped, tag = 'output window, operand 0']
    %26 = vsyncpa [#allocation3], 0
    %s27 = scalar_lea.sflag [#allocation3], 1
    %28 = vsyncpa %s27, 0
    %29 = vsyncpa [#allocation6], 0
    %s30 = scalar_lea.sflag [#allocation6], 1
    %31 = vsyncpa %s30, 0
    %32 = vsyncpa [#allocation9], 0
    %33 = vsyncpa [#allocation12], 0
    %34 = vsyncpa [#allocation15], 0
    %35 = vsyncpa [#allocation18], 0
    %36 = vsyncpa [#allocation4], 0
    %s37 = scalar_lea.sflag [#allocation4], 1
    %38 = vsyncpa %s37, 0
    loop: start=0, step=1, limit=4
    $region2: #{tpu_custom_call.1} parent=1 // loop_pre_header
      _
    $region3: #{tpu_custom_call.1} parent=1 // loop_header
      %s40 = sphi 0, %s44
      %p41 = scmp.ge.s32.totalorder %s40, 4
      %s50 = sphi 0, %s52
      %s53 = sphi 0, %s50
      %s54 = sphi 0, %s53
      %s70 = sphi 0, %s54
      %s76 = sphi 0, %s78
      %s79 = sphi 0, %s76
      %s80 = sphi 0, %s79
      %s96 = sphi 0, %s80
      %s102 = sphi 0, %s104
      %s105 = sphi 0, %s102
      %s106 = sphi 0, %s105
      %s122 = sphi 0, %s106
      %s126 = sphi 0, %s126
      %s128 = sphi 0, %s126
      %s129 = sphi 0, %s128
      %s143 = sphi 0, %s129
      %s147 = sphi 0, %s147
      %s149 = sphi 0, %s147
      %s150 = sphi 0, %s149
      %s164 = sphi 0, %s150
      %s168 = sphi 0, %s168
      %s170 = sphi 0, %s168
      %s171 = sphi 0, %s170
      %s185 = sphi 0, %s171
      %s189 = sphi 0, %s189
      %s191 = sphi 0, %s189
      %s192 = sphi 0, %s191
      %s206 = sphi 0, %s192
      %s210 = sphi 0, %s210
      %s212 = sphi 0, %s210
      %s213 = sphi 0, %s212
      %s227 = sphi 0, %s213
      %s231 = sphi 0, %s231
      %s233 = sphi 0, %s231
      %s234 = sphi 0, %s233
      %s248 = sphi 0, %s234
      %s252 = sphi 0, %s252
      %s254 = sphi 0, %s252
      %s255 = sphi 0, %s254
      %s269 = sphi 0, %s255
      %s273 = sphi 0, %s273
      %s275 = sphi 0, %s273
      %s276 = sphi 0, %s275
      %s290 = sphi 0, %s276
      %s294 = sphi 0, %s294
      %s296 = sphi 0, %s294
      %s297 = sphi 0, %s296
      %s311 = sphi 0, %s297
      %s315 = sphi 0, %s315
      %s317 = sphi 0, %s315
      %s318 = sphi 0, %s317
      %s332 = sphi 0, %s318
      %s336 = sphi 0, %s336
      %s338 = sphi 0, %s336
      %s339 = sphi 0, %s338
      %s353 = sphi 0, %s339
      %s357 = sphi 0, %s357
      %s359 = sphi 0, %s357
      %s360 = sphi 0, %s359
      %s374 = sphi 0, %s360
      %s378 = sphi 0, %s378
      %s380 = sphi 0, %s378
      %s381 = sphi 0, %s380
      %s395 = sphi 0, %s381
      %s399 = sphi 0, %s399
      %s401 = sphi 0, %s399
      %s402 = sphi 0, %s401
      %s416 = sphi 0, %s402
      %s420 = sphi 0, %s420
      %s422 = sphi 0, %s420
      %s423 = sphi 0, %s422
      %s437 = sphi 0, %s423
      %s441 = sphi 0, %s441
      %s443 = sphi 0, %s441
      %s444 = sphi 0, %s443
      %s458 = sphi 0, %s444
      %s462 = sphi 0, %s462
      %s464 = sphi 0, %s462
      %s465 = sphi 0, %s464
      %s479 = sphi 0, %s465
      %s483 = sphi 0, %s483
      %s485 = sphi 0, %s483
      %s486 = sphi 0, %s485
      %s500 = sphi 0, %s486
      %s506 = sphi 0, %s508
      %s509 = sphi 0, %s506
      %s510 = sphi 0, %s509
      %s526 = sphi 0, %s510
    $region4: #{tpu_custom_call.1} parent=1 // loop_header_branch
      %43 = sbr.rel (%p41) target = $region8
    $region5: #{tpu_custom_call.1} parent=1 // loop_body
      %s45 = ssub.s32 %s40, 1
      %s46 = ssub.s32 %s40, 2
      %s47 = sadd.s32 %s40, 1
      %s48 = ssub.s32 %s40, %s47
      %p49 = scmp.eq.s32.totalorder %s48, 0
      %s51 = sadd.s32 %s50, 1
      %s52 = scalar_select %p49, %s50, %s51
      %p55 = pneg %p49
      %p56 = scmp.eq.s32.totalorder %s40, 1
      %p57 = por %p55, %p56
      %p58 = scmp.ne.s32.totalorder %s50, %s53
      %p59 = scmp.eq.s32.totalorder %s40, 0
      %p60 = por %p58, %p59
      %p61 = scmp.ne.s32.totalorder %s50, %s53
      %p62 = scmp.eq.s32.totalorder %s45, 1
      %p63 = por %p61, %p62
      %p64 = scmp.ne.s32.totalorder %s53, %s54
      %p65 = scmp.eq.s32.totalorder %s45, 0
      %p66 = por %p64, %p65
      %p67 = scmp.ne.s32.totalorder %s53, %s54
      %p68 = scmp.eq.s32.totalorder %s46, 1
      %p69 = por %p67, %p68
      %p71 = scmp.ne.s32.totalorder %s54, %s70
      %p72 = scmp.eq.s32.totalorder %s46, 0
      %p73 = por %p71, %p72
      %s74 = ssub.s32 %s40, %s47
      %p75 = scmp.eq.s32.totalorder %s74, 0
      %s77 = sadd.s32 %s76, 1
      %s78 = scalar_select %p75, %s76, %s77
      %p81 = pneg %p75
      %p82 = scmp.eq.s32.totalorder %s40, 1
      %p83 = por %p81, %p82
      %p84 = scmp.ne.s32.totalorder %s76, %s79
      %p85 = scmp.eq.s32.totalorder %s40, 0
      %p86 = por %p84, %p85
      %p87 = scmp.ne.s32.totalorder %s76, %s79
      %p88 = scmp.eq.s32.totalorder %s45, 1
      %p89 = por %p87, %p88
      %p90 = scmp.ne.s32.totalorder %s79, %s80
      %p91 = scmp.eq.s32.totalorder %s45, 0
      %p92 = por %p90, %p91
      %p93 = scmp.ne.s32.totalorder %s79, %s80
      %p94 = scmp.eq.s32.totalorder %s46, 1
      %p95 = por %p93, %p94
      %p97 = scmp.ne.s32.totalorder %s80, %s96
      %p98 = scmp.eq.s32.totalorder %s46, 0
      %p99 = por %p97, %p98
      %s100 = ssub.s32 %s40, %s47
      %p101 = scmp.eq.s32.totalorder %s100, 0
      %s103 = sadd.s32 %s102, 1
      %s104 = scalar_select %p101, %s102, %s103
      %p107 = pneg %p101
      %p108 = scmp.eq.s32.totalorder %s40, 1
      %p109 = por %p107, %p108
      %p110 = scmp.ne.s32.totalorder %s102, %s105
      %p111 = scmp.eq.s32.totalorder %s40, 0
      %p112 = por %p110, %p111
      %p113 = scmp.ne.s32.totalorder %s102, %s105
      %p114 = scmp.eq.s32.totalorder %s45, 1
      %p115 = por %p113, %p114
      %p116 = scmp.ne.s32.totalorder %s105, %s106
      %p117 = scmp.eq.s32.totalorder %s45, 0
      %p118 = por %p116, %p117
      %p119 = scmp.ne.s32.totalorder %s105, %s106
      %p120 = scmp.eq.s32.totalorder %s46, 1
      %p121 = por %p119, %p120
      %p123 = scmp.ne.s32.totalorder %s106, %s122
      %p124 = scmp.eq.s32.totalorder %s46, 0
      %p125 = por %p123, %p124
      %s127 = sadd.s32 %s126, 1
      %p130 = scmp.eq.s32.totalorder %s40, 1
      %p131 = scmp.ne.s32.totalorder %s126, %s128
      %p132 = scmp.eq.s32.totalorder %s40, 0
      %p133 = por %p131, %p132
      %p134 = scmp.ne.s32.totalorder %s126, %s128
      %p135 = scmp.eq.s32.totalorder %s45, 1
      %p136 = por %p134, %p135
      %p137 = scmp.ne.s32.totalorder %s128, %s129
      %p138 = scmp.eq.s32.totalorder %s45, 0
      %p139 = por %p137, %p138
      %p140 = scmp.ne.s32.totalorder %s128, %s129
      %p141 = scmp.eq.s32.totalorder %s46, 1
      %p142 = por %p140, %p141
      %p144 = scmp.ne.s32.totalorder %s129, %s143
      %p145 = scmp.eq.s32.totalorder %s46, 0
      %p146 = por %p144, %p145
      %s148 = sadd.s32 %s147, 1
      %p151 = scmp.eq.s32.totalorder %s40, 1
      %p152 = scmp.ne.s32.totalorder %s147, %s149
      %p153 = scmp.eq.s32.totalorder %s40, 0
      %p154 = por %p152, %p153
      %p155 = scmp.ne.s32.totalorder %s147, %s149
      %p156 = scmp.eq.s32.totalorder %s45, 1
      %p157 = por %p155, %p156
      %p158 = scmp.ne.s32.totalorder %s149, %s150
      %p159 = scmp.eq.s32.totalorder %s45, 0
      %p160 = por %p158, %p159
      %p161 = scmp.ne.s32.totalorder %s149, %s150
      %p162 = scmp.eq.s32.totalorder %s46, 1
      %p163 = por %p161, %p162
      %p165 = scmp.ne.s32.totalorder %s150, %s164
      %p166 = scmp.eq.s32.totalorder %s46, 0
      %p167 = por %p165, %p166
      %s169 = sadd.s32 %s168, 1
      %p172 = scmp.eq.s32.totalorder %s40, 1
      %p173 = scmp.ne.s32.totalorder %s168, %s170
      %p174 = scmp.eq.s32.totalorder %s40, 0
      %p175 = por %p173, %p174
      %p176 = scmp.ne.s32.totalorder %s168, %s170
      %p177 = scmp.eq.s32.totalorder %s45, 1
      %p178 = por %p176, %p177
      %p179 = scmp.ne.s32.totalorder %s170, %s171
      %p180 = scmp.eq.s32.totalorder %s45, 0
      %p181 = por %p179, %p180
      %p182 = scmp.ne.s32.totalorder %s170, %s171
      %p183 = scmp.eq.s32.totalorder %s46, 1
      %p184 = por %p182, %p183
      %p186 = scmp.ne.s32.totalorder %s171, %s185
      %p187 = scmp.eq.s32.totalorder %s46, 0
      %p188 = por %p186, %p187
      %s190 = sadd.s32 %s189, 1
      %p193 = scmp.eq.s32.totalorder %s40, 1
      %p194 = scmp.ne.s32.totalorder %s189, %s191
      %p195 = scmp.eq.s32.totalorder %s40, 0
      %p196 = por %p194, %p195
      %p197 = scmp.ne.s32.totalorder %s189, %s191
      %p198 = scmp.eq.s32.totalorder %s45, 1
      %p199 = por %p197, %p198
      %p200 = scmp.ne.s32.totalorder %s191, %s192
      %p201 = scmp.eq.s32.totalorder %s45, 0
      %p202 = por %p200, %p201
      %p203 = scmp.ne.s32.totalorder %s191, %s192
      %p204 = scmp.eq.s32.totalorder %s46, 1
      %p205 = por %p203, %p204
      %p207 = scmp.ne.s32.totalorder %s192, %s206
      %p208 = scmp.eq.s32.totalorder %s46, 0
      %p209 = por %p207, %p208
      %s211 = sadd.s32 %s210, 1
      %p214 = scmp.eq.s32.totalorder %s40, 1
      %p215 = scmp.ne.s32.totalorder %s210, %s212
      %p216 = scmp.eq.s32.totalorder %s40, 0
      %p217 = por %p215, %p216
      %p218 = scmp.ne.s32.totalorder %s210, %s212
      %p219 = scmp.eq.s32.totalorder %s45, 1
      %p220 = por %p218, %p219
      %p221 = scmp.ne.s32.totalorder %s212, %s213
      %p222 = scmp.eq.s32.totalorder %s45, 0
      %p223 = por %p221, %p222
      %p224 = scmp.ne.s32.totalorder %s212, %s213
      %p225 = scmp.eq.s32.totalorder %s46, 1
      %p226 = por %p224, %p225
      %p228 = scmp.ne.s32.totalorder %s213, %s227
      %p229 = scmp.eq.s32.totalorder %s46, 0
      %p230 = por %p228, %p229
      %s232 = sadd.s32 %s231, 1
      %p235 = scmp.eq.s32.totalorder %s40, 1
      %p236 = scmp.ne.s32.totalorder %s231, %s233
      %p237 = scmp.eq.s32.totalorder %s40, 0
      %p238 = por %p236, %p237
      %p239 = scmp.ne.s32.totalorder %s231, %s233
      %p240 = scmp.eq.s32.totalorder %s45, 1
      %p241 = por %p239, %p240
      %p242 = scmp.ne.s32.totalorder %s233, %s234
      %p243 = scmp.eq.s32.totalorder %s45, 0
      %p244 = por %p242, %p243
      %p245 = scmp.ne.s32.totalorder %s233, %s234
      %p246 = scmp.eq.s32.totalorder %s46, 1
      %p247 = por %p245, %p246
      %p249 = scmp.ne.s32.totalorder %s234, %s248
      %p250 = scmp.eq.s32.totalorder %s46, 0
      %p251 = por %p249, %p250
      %s253 = sadd.s32 %s252, 1
      %p256 = scmp.eq.s32.totalorder %s40, 1
      %p257 = scmp.ne.s32.totalorder %s252, %s254
      %p258 = scmp.eq.s32.totalorder %s40, 0
      %p259 = por %p257, %p258
      %p260 = scmp.ne.s32.totalorder %s252, %s254
      %p261 = scmp.eq.s32.totalorder %s45, 1
      %p262 = por %p260, %p261
      %p263 = scmp.ne.s32.totalorder %s254, %s255
      %p264 = scmp.eq.s32.totalorder %s45, 0
      %p265 = por %p263, %p264
      %p266 = scmp.ne.s32.totalorder %s254, %s255
      %p267 = scmp.eq.s32.totalorder %s46, 1
      %p268 = por %p266, %p267
      %p270 = scmp.ne.s32.totalorder %s255, %s269
      %p271 = scmp.eq.s32.totalorder %s46, 0
      %p272 = por %p270, %p271
      %s274 = sadd.s32 %s273, 1
      %p277 = scmp.eq.s32.totalorder %s40, 1
      %p278 = scmp.ne.s32.totalorder %s273, %s275
      %p279 = scmp.eq.s32.totalorder %s40, 0
      %p280 = por %p278, %p279
      %p281 = scmp.ne.s32.totalorder %s273, %s275
      %p282 = scmp.eq.s32.totalorder %s45, 1
      %p283 = por %p281, %p282
      %p284 = scmp.ne.s32.totalorder %s275, %s276
      %p285 = scmp.eq.s32.totalorder %s45, 0
      %p286 = por %p284, %p285
      %p287 = scmp.ne.s32.totalorder %s275, %s276
      %p288 = scmp.eq.s32.totalorder %s46, 1
      %p289 = por %p287, %p288
      %p291 = scmp.ne.s32.totalorder %s276, %s290
      %p292 = scmp.eq.s32.totalorder %s46, 0
      %p293 = por %p291, %p292
      %s295 = sadd.s32 %s294, 1
      %p298 = scmp.eq.s32.totalorder %s40, 1
      %p299 = scmp.ne.s32.totalorder %s294, %s296
      %p300 = scmp.eq.s32.totalorder %s40, 0
      %p301 = por %p299, %p300
      %p302 = scmp.ne.s32.totalorder %s294, %s296
      %p303 = scmp.eq.s32.totalorder %s45, 1
      %p304 = por %p302, %p303
      %p305 = scmp.ne.s32.totalorder %s296, %s297
      %p306 = scmp.eq.s32.totalorder %s45, 0
      %p307 = por %p305, %p306
      %p308 = scmp.ne.s32.totalorder %s296, %s297
      %p309 = scmp.eq.s32.totalorder %s46, 1
      %p310 = por %p308, %p309
      %p312 = scmp.ne.s32.totalorder %s297, %s311
      %p313 = scmp.eq.s32.totalorder %s46, 0
      %p314 = por %p312, %p313
      %s316 = sadd.s32 %s315, 1
      %p319 = scmp.eq.s32.totalorder %s40, 1
      %p320 = scmp.ne.s32.totalorder %s315, %s317
      %p321 = scmp.eq.s32.totalorder %s40, 0
      %p322 = por %p320, %p321
      %p323 = scmp.ne.s32.totalorder %s315, %s317
      %p324 = scmp.eq.s32.totalorder %s45, 1
      %p325 = por %p323, %p324
      %p326 = scmp.ne.s32.totalorder %s317, %s318
      %p327 = scmp.eq.s32.totalorder %s45, 0
      %p328 = por %p326, %p327
      %p329 = scmp.ne.s32.totalorder %s317, %s318
      %p330 = scmp.eq.s32.totalorder %s46, 1
      %p331 = por %p329, %p330
      %p333 = scmp.ne.s32.totalorder %s318, %s332
      %p334 = scmp.eq.s32.totalorder %s46, 0
      %p335 = por %p333, %p334
      %s337 = sadd.s32 %s336, 1
      %p340 = scmp.eq.s32.totalorder %s40, 1
      %p341 = scmp.ne.s32.totalorder %s336, %s338
      %p342 = scmp.eq.s32.totalorder %s40, 0
      %p343 = por %p341, %p342
      %p344 = scmp.ne.s32.totalorder %s336, %s338
      %p345 = scmp.eq.s32.totalorder %s45, 1
      %p346 = por %p344, %p345
      %p347 = scmp.ne.s32.totalorder %s338, %s339
      %p348 = scmp.eq.s32.totalorder %s45, 0
      %p349 = por %p347, %p348
      %p350 = scmp.ne.s32.totalorder %s338, %s339
      %p351 = scmp.eq.s32.totalorder %s46, 1
      %p352 = por %p350, %p351
      %p354 = scmp.ne.s32.totalorder %s339, %s353
      %p355 = scmp.eq.s32.totalorder %s46, 0
      %p356 = por %p354, %p355
      %s358 = sadd.s32 %s357, 1
      %p361 = scmp.eq.s32.totalorder %s40, 1
      %p362 = scmp.ne.s32.totalorder %s357, %s359
      %p363 = scmp.eq.s32.totalorder %s40, 0
      %p364 = por %p362, %p363
      %p365 = scmp.ne.s32.totalorder %s357, %s359
      %p366 = scmp.eq.s32.totalorder %s45, 1
      %p367 = por %p365, %p366
      %p368 = scmp.ne.s32.totalorder %s359, %s360
      %p369 = scmp.eq.s32.totalorder %s45, 0
      %p370 = por %p368, %p369
      %p371 = scmp.ne.s32.totalorder %s359, %s360
      %p372 = scmp.eq.s32.totalorder %s46, 1
      %p373 = por %p371, %p372
      %p375 = scmp.ne.s32.totalorder %s360, %s374
      %p376 = scmp.eq.s32.totalorder %s46, 0
      %p377 = por %p375, %p376
      %s379 = sadd.s32 %s378, 1
      %p382 = scmp.eq.s32.totalorder %s40, 1
      %p383 = scmp.ne.s32.totalorder %s378, %s380
      %p384 = scmp.eq.s32.totalorder %s40, 0
      %p385 = por %p383, %p384
      %p386 = scmp.ne.s32.totalorder %s378, %s380
      %p387 = scmp.eq.s32.totalorder %s45, 1
      %p388 = por %p386, %p387
      %p389 = scmp.ne.s32.totalorder %s380, %s381
      %p390 = scmp.eq.s32.totalorder %s45, 0
      %p391 = por %p389, %p390
      %p392 = scmp.ne.s32.totalorder %s380, %s381
      %p393 = scmp.eq.s32.totalorder %s46, 1
      %p394 = por %p392, %p393
      %p396 = scmp.ne.s32.totalorder %s381, %s395
      %p397 = scmp.eq.s32.totalorder %s46, 0
      %p398 = por %p396, %p397
      %s400 = sadd.s32 %s399, 1
      %p403 = scmp.eq.s32.totalorder %s40, 1
      %p404 = scmp.ne.s32.totalorder %s399, %s401
      %p405 = scmp.eq.s32.totalorder %s40, 0
      %p406 = por %p404, %p405
      %p407 = scmp.ne.s32.totalorder %s399, %s401
      %p408 = scmp.eq.s32.totalorder %s45, 1
      %p409 = por %p407, %p408
      %p410 = scmp.ne.s32.totalorder %s401, %s402
      %p411 = scmp.eq.s32.totalorder %s45, 0
      %p412 = por %p410, %p411
      %p413 = scmp.ne.s32.totalorder %s401, %s402
      %p414 = scmp.eq.s32.totalorder %s46, 1
      %p415 = por %p413, %p414
      %p417 = scmp.ne.s32.totalorder %s402, %s416
      %p418 = scmp.eq.s32.totalorder %s46, 0
      %p419 = por %p417, %p418
      %s421 = sadd.s32 %s420, 1
      %p424 = scmp.eq.s32.totalorder %s40, 1
      %p425 = scmp.ne.s32.totalorder %s420, %s422
      %p426 = scmp.eq.s32.totalorder %s40, 0
      %p427 = por %p425, %p426
      %p428 = scmp.ne.s32.totalorder %s420, %s422
      %p429 = scmp.eq.s32.totalorder %s45, 1
      %p430 = por %p428, %p429
      %p431 = scmp.ne.s32.totalorder %s422, %s423
      %p432 = scmp.eq.s32.totalorder %s45, 0
      %p433 = por %p431, %p432
      %p434 = scmp.ne.s32.totalorder %s422, %s423
      %p435 = scmp.eq.s32.totalorder %s46, 1
      %p436 = por %p434, %p435
      %p438 = scmp.ne.s32.totalorder %s423, %s437
      %p439 = scmp.eq.s32.totalorder %s46, 0
      %p440 = por %p438, %p439
      %s442 = sadd.s32 %s441, 1
      %p445 = scmp.eq.s32.totalorder %s40, 1
      %p446 = scmp.ne.s32.totalorder %s441, %s443
      %p447 = scmp.eq.s32.totalorder %s40, 0
      %p448 = por %p446, %p447
      %p449 = scmp.ne.s32.totalorder %s441, %s443
      %p450 = scmp.eq.s32.totalorder %s45, 1
      %p451 = por %p449, %p450
      %p452 = scmp.ne.s32.totalorder %s443, %s444
      %p453 = scmp.eq.s32.totalorder %s45, 0
      %p454 = por %p452, %p453
      %p455 = scmp.ne.s32.totalorder %s443, %s444
      %p456 = scmp.eq.s32.totalorder %s46, 1
      %p457 = por %p455, %p456
      %p459 = scmp.ne.s32.totalorder %s444, %s458
      %p460 = scmp.eq.s32.totalorder %s46, 0
      %p461 = por %p459, %p460
      %s463 = sadd.s32 %s462, 1
      %p466 = scmp.eq.s32.totalorder %s40, 1
      %p467 = scmp.ne.s32.totalorder %s462, %s464
      %p468 = scmp.eq.s32.totalorder %s40, 0
      %p469 = por %p467, %p468
      %p470 = scmp.ne.s32.totalorder %s462, %s464
      %p471 = scmp.eq.s32.totalorder %s45, 1
      %p472 = por %p470, %p471
      %p473 = scmp.ne.s32.totalorder %s464, %s465
      %p474 = scmp.eq.s32.totalorder %s45, 0
      %p475 = por %p473, %p474
      %p476 = scmp.ne.s32.totalorder %s464, %s465
      %p477 = scmp.eq.s32.totalorder %s46, 1
      %p478 = por %p476, %p477
      %p480 = scmp.ne.s32.totalorder %s465, %s479
      %p481 = scmp.eq.s32.totalorder %s46, 0
      %p482 = por %p480, %p481
      %s484 = sadd.s32 %s483, 1
      %p487 = scmp.eq.s32.totalorder %s40, 1
      %p488 = scmp.ne.s32.totalorder %s483, %s485
      %p489 = scmp.eq.s32.totalorder %s40, 0
      %p490 = por %p488, %p489
      %p491 = scmp.ne.s32.totalorder %s483, %s485
      %p492 = scmp.eq.s32.totalorder %s45, 1
      %p493 = por %p491, %p492
      %p494 = scmp.ne.s32.totalorder %s485, %s486
      %p495 = scmp.eq.s32.totalorder %s45, 0
      %p496 = por %p494, %p495
      %p497 = scmp.ne.s32.totalorder %s485, %s486
      %p498 = scmp.eq.s32.totalorder %s46, 1
      %p499 = por %p497, %p498
      %p501 = scmp.ne.s32.totalorder %s486, %s500
      %p502 = scmp.eq.s32.totalorder %s46, 0
      %p503 = por %p501, %p502
      %s504 = ssub.s32 %s40, %s47
      %p505 = scmp.eq.s32.totalorder %s504, 0
      %s507 = sadd.s32 %s506, 1
      %s508 = scalar_select %p505, %s506, %s507
      %p511 = pneg %p505
      %p512 = scmp.eq.s32.totalorder %s40, 1
      %p513 = por %p511, %p512
      %p514 = scmp.ne.s32.totalorder %s506, %s509
      %p515 = scmp.eq.s32.totalorder %s40, 0
      %p516 = por %p514, %p515
      %p517 = scmp.ne.s32.totalorder %s506, %s509
      %p518 = scmp.eq.s32.totalorder %s45, 1
      %p519 = por %p517, %p518
      %p520 = scmp.ne.s32.totalorder %s509, %s510
      %p521 = scmp.eq.s32.totalorder %s45, 0
      %p522 = por %p520, %p521
      %p523 = scmp.ne.s32.totalorder %s509, %s510
      %p524 = scmp.eq.s32.totalorder %s46, 1
      %p525 = por %p523, %p524
      %p527 = scmp.ne.s32.totalorder %s510, %s526
      %p528 = scmp.eq.s32.totalorder %s46, 0
      %p529 = por %p527, %p528
      %p530 = scmp.le.s32.totalorder 1, %s40
      %p531 = scmp.lt.s32.totalorder %s40, 3
      %p532 = pnand %p530, %p531
      %p533 = pneg %p532
      // Predicated region
      $region9: #{tpu_custom_call.1} parent=5 // pred_check
        _
      $region10: #{tpu_custom_call.1} parent=5 // pred_check_branch
        %535 = sbr.rel (%p532) target = $region12
      $region11: #{tpu_custom_call.1} parent=5 // pred_region
        %s536 = ssub.s32 %s40, 1
        // Predicated region
        $region13: #{tpu_custom_call.1} parent=11 // pred_check
          %p537 = pneg %p139
        $region14: #{tpu_custom_call.1} parent=11 // pred_check_branch
          %539 = sbr.rel (%p537) target = $region16
        $region15: #{tpu_custom_call.1} parent=11 // pred_region
          _
        $region16: #{tpu_custom_call.1} parent=11 // pred_fallthru
          _
        // Predicated region
        $region17: #{tpu_custom_call.1} parent=11 // pred_check
          %p540 = pneg %p160
        $region18: #{tpu_custom_call.1} parent=11 // pred_check_branch
          %542 = sbr.rel (%p540) target = $region20
        $region19: #{tpu_custom_call.1} parent=11 // pred_region
          _
        $region20: #{tpu_custom_call.1} parent=11 // pred_fallthru
          _
        // Predicated region
        $region21: #{tpu_custom_call.1} parent=11 // pred_check
          %p543 = pneg %p181
        $region22: #{tpu_custom_call.1} parent=11 // pred_check_branch
          %545 = sbr.rel (%p543) target = $region24
        $region23: #{tpu_custom_call.1} parent=11 // pred_region
          %s547 = ssub.s32 16, 16
          %548 = vsyncadd [#allocation6], %s547
          %s550 = sshll.u32 [#allocation7], 4
          %s551 = int_to_ptr.vmem [resolvable:$true] %s550
          %553 = dma.hbm_to_vmem [thread:$0]  %s5, 16, %s551, [#allocation6]
        $region24: #{tpu_custom_call.1} parent=11 // pred_fallthru
          _
        // Predicated region
        $region25: #{tpu_custom_call.1} parent=11 // pred_check
          %p554 = pneg %p202
        $region26: #{tpu_custom_call.1} parent=11 // pred_check_branch
          %556 = sbr.rel (%p554) target = $region28
        $region27: #{tpu_custom_call.1} parent=11 // pred_region
          %s558 = ssub.s32 16, 16
          %559 = vsyncadd [#allocation9], %s558
          %s561 = sshll.u32 [#allocation8], 4
          %s562 = int_to_ptr.vmem [resolvable:$true] %s561
          %564 = dma.hbm_to_vmem [thread:$0]  %s6, 16, %s562, [#allocation9]
        $region28: #{tpu_custom_call.1} parent=11 // pred_fallthru
          _
        // Predicated region
        $region29: #{tpu_custom_call.1} parent=11 // pred_check
          %p565 = pneg %p223
        $region30: #{tpu_custom_call.1} parent=11 // pred_check_branch
          %567 = sbr.rel (%p565) target = $region32
        $region31: #{tpu_custom_call.1} parent=11 // pred_region
          _
        $region32: #{tpu_custom_call.1} parent=11 // pred_fallthru
          _
        // Predicated region
        $region33: #{tpu_custom_call.1} parent=11 // pred_check
          %p568 = pneg %p244
        $region34: #{tpu_custom_call.1} parent=11 // pred_check_branch
          %570 = sbr.rel (%p568) target = $region36
        $region35: #{tpu_custom_call.1} parent=11 // pred_region
          %s572 = ssub.s32 16, 16
          %573 = vsyncadd [#allocation9], %s572
          %s575 = sshll.u32 [#allocation10], 4
          %s576 = int_to_ptr.vmem [resolvable:$true] %s575
          %578 = dma.hbm_to_vmem [thread:$0]  %s8, 16, %s576, [#allocation9]
        $region36: #{tpu_custom_call.1} parent=11 // pred_fallthru
          _
        // Predicated region
        $region37: #{tpu_custom_call.1} parent=11 // pred_check
          %p579 = pneg %p265
        $region38: #{tpu_custom_call.1} parent=11 // pred_check_branch
          %581 = sbr.rel (%p579) target = $region40
        $region39: #{tpu_custom_call.1} parent=11 // pred_region
          _
        $region40: #{tpu_custom_call.1} parent=11 // pred_fallthru
          _
        // Predicated region
        $region41: #{tpu_custom_call.1} parent=11 // pred_check
          %p582 = pneg %p286
        $region42: #{tpu_custom_call.1} parent=11 // pred_check_branch
          %584 = sbr.rel (%p582) target = $region44
        $region43: #{tpu_custom_call.1} parent=11 // pred_region
          %s586 = ssub.s32 16, 16
          %587 = vsyncadd [#allocation12], %s586
          %s589 = sshll.u32 [#allocation11], 4
          %s590 = int_to_ptr.vmem [resolvable:$true] %s589
          %592 = dma.hbm_to_vmem [thread:$0]  %s10, 16, %s590, [#allocation12]
        $region44: #{tpu_custom_call.1} parent=11 // pred_fallthru
          _
        // Predicated region
        $region45: #{tpu_custom_call.1} parent=11 // pred_check
          %p593 = pneg %p307
        $region46: #{tpu_custom_call.1} parent=11 // pred_check_branch
          %595 = sbr.rel (%p593) target = $region48
        $region47: #{tpu_custom_call.1} parent=11 // pred_region
          _
        $region48: #{tpu_custom_call.1} parent=11 // pred_fallthru
          _
        // Predicated region
        $region49: #{tpu_custom_call.1} parent=11 // pred_check
          %p596 = pneg %p328
        $region50: #{tpu_custom_call.1} parent=11 // pred_check_branch
          %598 = sbr.rel (%p596) target = $region52
        $region51: #{tpu_custom_call.1} parent=11 // pred_region
          %s600 = ssub.s32 16, 16
          %601 = vsyncadd [#allocation12], %s600
          %s603 = sshll.u32 [#allocation13], 4
          %s604 = int_to_ptr.vmem [resolvable:$true] %s603
          %606 = dma.hbm_to_vmem [thread:$0]  %s12, 16, %s604, [#allocation12]
        $region52: #{tpu_custom_call.1} parent=11 // pred_fallthru
          _
        // Predicated region
        $region53: #{tpu_custom_call.1} parent=11 // pred_check
          %p607 = pneg %p349
        $region54: #{tpu_custom_call.1} parent=11 // pred_check_branch
          %609 = sbr.rel (%p607) target = $region56
        $region55: #{tpu_custom_call.1} parent=11 // pred_region
          %s611 = ssub.s32 64, 64
          %612 = vsyncadd [#allocation15], %s611
          %s614 = sshll.u32 [#allocation14], 4
          %s615 = int_to_ptr.vmem [resolvable:$true] %s614
          %617 = dma.hbm_to_vmem [thread:$0]  %s13, 64, %s615, [#allocation15]
        $region56: #{tpu_custom_call.1} parent=11 // pred_fallthru
          _
        // Predicated region
        $region57: #{tpu_custom_call.1} parent=11 // pred_check
          %p618 = pneg %p370
        $region58: #{tpu_custom_call.1} parent=11 // pred_check_branch
          %620 = sbr.rel (%p618) target = $region60
        $region59: #{tpu_custom_call.1} parent=11 // pred_region
          %s622 = ssub.s32 64, 64
          %623 = vsyncadd [#allocation15], %s622
          %s625 = sshll.u32 [#allocation16], 4
          %s626 = int_to_ptr.vmem [resolvable:$true] %s625
          %628 = dma.hbm_to_vmem [thread:$0]  %s14, 64, %s626, [#allocation15]
        $region60: #{tpu_custom_call.1} parent=11 // pred_fallthru
          _
        // Predicated region
        $region61: #{tpu_custom_call.1} parent=11 // pred_check
          %p629 = pneg %p391
        $region62: #{tpu_custom_call.1} parent=11 // pred_check_branch
          %631 = sbr.rel (%p629) target = $region64
        $region63: #{tpu_custom_call.1} parent=11 // pred_region
          _
        $region64: #{tpu_custom_call.1} parent=11 // pred_fallthru
          _
        // Predicated region
        $region65: #{tpu_custom_call.1} parent=11 // pred_check
          %p632 = pneg %p412
        $region66: #{tpu_custom_call.1} parent=11 // pred_check_branch
          %634 = sbr.rel (%p632) target = $region68
        $region67: #{tpu_custom_call.1} parent=11 // pred_region
          _
        $region68: #{tpu_custom_call.1} parent=11 // pred_fallthru
          _
        // Predicated region
        $region69: #{tpu_custom_call.1} parent=11 // pred_check
          %p635 = pneg %p433
        $region70: #{tpu_custom_call.1} parent=11 // pred_check_branch
          %637 = sbr.rel (%p635) target = $region72
        $region71: #{tpu_custom_call.1} parent=11 // pred_region
          _
        $region72: #{tpu_custom_call.1} parent=11 // pred_fallthru
          _
        // Predicated region
        $region73: #{tpu_custom_call.1} parent=11 // pred_check
          %p638 = pneg %p454
        $region74: #{tpu_custom_call.1} parent=11 // pred_check_branch
          %640 = sbr.rel (%p638) target = $region76
        $region75: #{tpu_custom_call.1} parent=11 // pred_region
          _
        $region76: #{tpu_custom_call.1} parent=11 // pred_fallthru
          _
        // Predicated region
        $region77: #{tpu_custom_call.1} parent=11 // pred_check
          %p641 = pneg %p475
        $region78: #{tpu_custom_call.1} parent=11 // pred_check_branch
          %643 = sbr.rel (%p641) target = $region80
        $region79: #{tpu_custom_call.1} parent=11 // pred_region
          %s645 = ssub.s32 256, 256
          %646 = vsyncadd [#allocation18], %s645
          %s647 = sshll.u32 [#allocation17], 4
          %s648 = int_to_ptr.vmem [resolvable:$true] %s647
          %653 = dma.hbm_to_vmem [thread:$0]  %s19, 256, %s648, [#allocation18], 64, 64, 4
        $region80: #{tpu_custom_call.1} parent=11 // pred_fallthru
          _
        // Predicated region
        $region81: #{tpu_custom_call.1} parent=11 // pred_check
          %p654 = pneg %p496
        $region82: #{tpu_custom_call.1} parent=11 // pred_check_branch
          %656 = sbr.rel (%p654) target = $region84
        $region83: #{tpu_custom_call.1} parent=11 // pred_region
          _
        $region84: #{tpu_custom_call.1} parent=11 // pred_fallthru
          _
      $region12: #{tpu_custom_call.1} parent=5 // pred_fallthru
        _
      %p657 = scmp.lt.s32.totalorder %s40, 2
      // Predicated region
      $region85: #{tpu_custom_call.1} parent=5 // pred_check
        %p658 = pneg %p657
      $region86: #{tpu_custom_call.1} parent=5 // pred_check_branch
        %660 = sbr.rel (%p658) target = $region88
      $region87: #{tpu_custom_call.1} parent=5 // pred_region
        // Predicated region
        $region89: #{tpu_custom_call.1} parent=87 // pred_check
          %p661 = pneg %p60
        $region90: #{tpu_custom_call.1} parent=87 // pred_check_branch
          %663 = sbr.rel (%p661) target = $region92
        $region91: #{tpu_custom_call.1} parent=87 // pred_region
          %s664 = sand.u32 %s50, 1
          %s665 = scalar_lea.sflag [#allocation3], %s664
          %s666 = sand.u32 %s50, 1
          %s667 = smul.addr %s666, 4
          %s668 = scalar_lea.vmem [#allocation2], %s667
          %s670 = ssub.s32 64, 64
          %671 = vsyncadd %s665, %s670
          %s672 = smul.addr %s40, 64
          %s673 = scalar_lea.hbm %s0, %s672
          %s675 = sshll.u32 %s668, 4
          %s676 = int_to_ptr.vmem [resolvable:$true] %s675
          %678 = dma.hbm_to_vmem [thread:$0]  %s673, 64, %s676, %s665
        $region92: #{tpu_custom_call.1} parent=87 // pred_fallthru
          _
        // Predicated region
        $region93: #{tpu_custom_call.1} parent=87 // pred_check
          %p679 = pneg %p86
        $region94: #{tpu_custom_call.1} parent=87 // pred_check_branch
          %681 = sbr.rel (%p679) target = $region96
        $region95: #{tpu_custom_call.1} parent=87 // pred_region
          %p682 = scmp.lt.s32.totalorder %s40, 1
          %s683 = scalar_select %p682, %s40, 1
          %s684 = smul.addr %s683, 8
          %s685 = scalar_lea.vmem %s1, %s684
        $region96: #{tpu_custom_call.1} parent=87 // pred_fallthru
          _
        // Predicated region
        $region97: #{tpu_custom_call.1} parent=87 // pred_check
          %p686 = pneg %p112
        $region98: #{tpu_custom_call.1} parent=87 // pred_check_branch
          %688 = sbr.rel (%p686) target = $region100
        $region99: #{tpu_custom_call.1} parent=87 // pred_region
          %s689 = sand.u32 %s40, 1
          %s690 = scalar_lea.sflag [#allocation6], %s689
          %s691 = sand.u32 %s102, 1
          %s692 = scalar_lea.vmem [#allocation5], %s691
          %s694 = ssub.s32 16, 16
          %695 = vsyncadd %s690, %s694
          %s696 = smul.addr %s40, 16
          %s697 = scalar_lea.hbm %s2, %s696
          %s699 = sshll.u32 %s692, 4
          %s700 = int_to_ptr.vmem [resolvable:$true] %s699
          %702 = dma.hbm_to_vmem [thread:$0]  %s697, 16, %s700, %s690
        $region100: #{tpu_custom_call.1} parent=87 // pred_fallthru
          _
      $region88: #{tpu_custom_call.1} parent=5 // pred_fallthru
        _
      %p703 = scmp.le.s32.totalorder 1, %s40
      %p704 = scmp.lt.s32.totalorder %s40, 3
      %p705 = pnand %p703, %p704
      %p706 = pneg %p705
      // Predicated region
      $region101: #{tpu_custom_call.1} parent=5 // pred_check
        _
      $region102: #{tpu_custom_call.1} parent=5 // pred_check_branch
        %708 = sbr.rel (%p705) target = $region104
      $region103: #{tpu_custom_call.1} parent=5 // pred_region
        %s709 = ssub.s32 %s40, 1
        %s710 = sand.u32 %s53, 1
        %s711 = scalar_lea.sflag [#allocation3], %s710
        %s712 = sand.u32 %s53, 1
        %s713 = smul.addr %s712, 4
        %s714 = scalar_lea.vmem [#allocation2], %s713
        // Predicated region
        $region105: #{tpu_custom_call.1} parent=103 // pred_check
          %p715 = pneg %p66
        $region106: #{tpu_custom_call.1} parent=103 // pred_check_branch
          %717 = sbr.rel (%p715) target = $region108
        $region107: #{tpu_custom_call.1} parent=103 // pred_region
          %718 = dma.done %s711, 64
        $region108: #{tpu_custom_call.1} parent=103 // pred_fallthru
          _
        %s719 = sand.u32 %s45, 1
        %s720 = scalar_lea.sflag [#allocation6], %s719
        %s721 = sand.u32 %s105, 1
        %s722 = scalar_lea.vmem [#allocation5], %s721
        // Predicated region
        $region109: #{tpu_custom_call.1} parent=103 // pred_check
          %p723 = pneg %p118
        $region110: #{tpu_custom_call.1} parent=103 // pred_check_branch
          %725 = sbr.rel (%p723) target = $region112
        $region111: #{tpu_custom_call.1} parent=103 // pred_region
          %726 = dma.done %s720, 16
        $region112: #{tpu_custom_call.1} parent=103 // pred_fallthru
          _
        // Predicated region
        $region113: #{tpu_custom_call.1} parent=103 // pred_check
          %p727 = pneg %p181
        $region114: #{tpu_custom_call.1} parent=103 // pred_check_branch
          %729 = sbr.rel (%p727) target = $region116
        $region115: #{tpu_custom_call.1} parent=103 // pred_region
          %730 = dma.done [#allocation6], 16
        $region116: #{tpu_custom_call.1} parent=103 // pred_fallthru
          _
        // Predicated region
        $region117: #{tpu_custom_call.1} parent=103 // pred_check
          %p731 = pneg %p202
        $region118: #{tpu_custom_call.1} parent=103 // pred_check_branch
          %733 = sbr.rel (%p731) target = $region120
        $region119: #{tpu_custom_call.1} parent=103 // pred_region
          %734 = dma.done [#allocation9], 16
        $region120: #{tpu_custom_call.1} parent=103 // pred_fallthru
          _
        // Predicated region
        $region121: #{tpu_custom_call.1} parent=103 // pred_check
          %p735 = pneg %p244
        $region122: #{tpu_custom_call.1} parent=103 // pred_check_branch
          %737 = sbr.rel (%p735) target = $region124
        $region123: #{tpu_custom_call.1} parent=103 // pred_region
          %738 = dma.done [#allocation9], 16
        $region124: #{tpu_custom_call.1} parent=103 // pred_fallthru
          _
        // Predicated region
        $region125: #{tpu_custom_call.1} parent=103 // pred_check
          %p739 = pneg %p286
        $region126: #{tpu_custom_call.1} parent=103 // pred_check_branch
          %741 = sbr.rel (%p739) target = $region128
        $region127: #{tpu_custom_call.1} parent=103 // pred_region
          %742 = dma.done [#allocation12], 16
        $region128: #{tpu_custom_call.1} parent=103 // pred_fallthru
          _
        // Predicated region
        $region129: #{tpu_custom_call.1} parent=103 // pred_check
          %p743 = pneg %p328
        $region130: #{tpu_custom_call.1} parent=103 // pred_check_branch
          %745 = sbr.rel (%p743) target = $region132
        $region131: #{tpu_custom_call.1} parent=103 // pred_region
          %746 = dma.done [#allocation12], 16
        $region132: #{tpu_custom_call.1} parent=103 // pred_fallthru
          _
        // Predicated region
        $region133: #{tpu_custom_call.1} parent=103 // pred_check
          %p747 = pneg %p349
        $region134: #{tpu_custom_call.1} parent=103 // pred_check_branch
          %749 = sbr.rel (%p747) target = $region136
        $region135: #{tpu_custom_call.1} parent=103 // pred_region
          %750 = dma.done [#allocation15], 64
        $region136: #{tpu_custom_call.1} parent=103 // pred_fallthru
          _
        // Predicated region
        $region137: #{tpu_custom_call.1} parent=103 // pred_check
          %p751 = pneg %p370
        $region138: #{tpu_custom_call.1} parent=103 // pred_check_branch
          %753 = sbr.rel (%p751) target = $region140
        $region139: #{tpu_custom_call.1} parent=103 // pred_region
          %754 = dma.done [#allocation15], 64
        $region140: #{tpu_custom_call.1} parent=103 // pred_fallthru
          _
        // Predicated region
        $region141: #{tpu_custom_call.1} parent=103 // pred_check
          %p755 = pneg %p475
        $region142: #{tpu_custom_call.1} parent=103 // pred_check_branch
          %757 = sbr.rel (%p755) target = $region144
        $region143: #{tpu_custom_call.1} parent=103 // pred_region
          %758 = dma.done [#allocation18], 256
        $region144: #{tpu_custom_call.1} parent=103 // pred_fallthru
          _
        %s759 = sand.u32 %s53, 1
        %s760 = scalar_lea.sflag [#allocation3], %s759
        %s761 = sand.u32 %s53, 1
        %s762 = smul.addr %s761, 4
        %s763 = scalar_lea.vmem [#allocation2], %s762
        %p764 = pneg %p66
        %p765 = pneg %p63
        %p766 = scmp.lt.s32.totalorder %s45, 1
        %s767 = scalar_select %p766, %s45, 1
        %s768 = smul.addr %s767, 8
        %s769 = scalar_lea.vmem %s1, %s768
        %p770 = pneg %p92
        %p771 = pneg %p89
        %s772 = sand.u32 %s45, 1
        %s773 = scalar_lea.sflag [#allocation6], %s772
        %s774 = sand.u32 %s105, 1
        %s775 = scalar_lea.vmem [#allocation5], %s774
        %p776 = pneg %p118
        %p777 = pneg %p115
        %p778 = pneg %p139
        %p779 = pneg %p136
        %p780 = pneg %p160
        %p781 = pneg %p157
        %p782 = pneg %p181
        %p783 = pneg %p178
        %p784 = pneg %p202
        %p785 = pneg %p199
        %p786 = pneg %p223
        %p787 = pneg %p220
        %p788 = pneg %p244
        %p789 = pneg %p241
        %p790 = pneg %p265
        %p791 = pneg %p262
        %p792 = pneg %p286
        %p793 = pneg %p283
        %p794 = pneg %p307
        %p795 = pneg %p304
        %p796 = pneg %p328
        %p797 = pneg %p325
        %p798 = pneg %p349
        %p799 = pneg %p346
        %p800 = pneg %p370
        %p801 = pneg %p367
        %p802 = pneg %p391
        %p803 = pneg %p388
        %p804 = pneg %p412
        %p805 = pneg %p409
        %p806 = pneg %p433
        %p807 = pneg %p430
        %p808 = pneg %p454
        %p809 = pneg %p451
        %p810 = pneg %p475
        %p811 = pneg %p472
        %p812 = pneg %p496
        %p813 = pneg %p493
        %p814 = pneg %p522
        %p815 = pneg %p519
        %s816 = sand.u32 %s509, 1
        %s817 = scalar_lea.sflag [#allocation4], %s816
        %s818 = sand.u32 %s509, 1
        %s819 = smul.addr %s818, 4
        %s820 = scalar_lea.vmem [#allocation19], %s819
        %p821 = scmp.lt.s32.totalorder %s45, 1
        %s822 = scalar_select %p821, %s45, 1
        %s823 = smul.addr %s822, 8
        %s824 = scalar_lea.vmem %s1, %s823
        %v826 = vld [vmem:[%s714] sm:$0xf]
        %v827 = vld [vmem:[%s824] sm:$0x1f]
        %v828 = vpack.c.bf16 %v826, %v826
        %v829 = vld [vmem:[%s3] sm:$0xf]
        %v830 = vld [vmem:[%s3 + $0x4] sm:$0xf]
        %v831 = vld [vmem:[%s3 + $0x8] sm:$0xf]
        %v832 = vld [vmem:[%s3 + $0xc] sm:$0xf]
        %v833 = vld [vmem:[%s4] sm:$0x1]
        %v835 = vlaneseq
        %v836 = vshrl.u32 %v835, 7
        %v837 = vsub.s32 0, %v836
        %v838 = vrot.slane %v833, %v837
        %v844 = vunpack.c.l.b16 %v829
        %v845 = vunpack.c.l.b16 %v830
        %v846 = vunpack.c.l.b16 %v831
        %v847 = vunpack.c.l.b16 %v832
        %v848 = vpack.c.b16 %v845, %v844
        %v849 = vpack.c.b16 %v847, %v846
        %vm852 = vcmask 261120
        %v854 = vsel %vm852, %v828, 0
        %856 = vmatprep.subr.bf16.mxu0 0
        %857 = vmatpush1.bf16.msra.mxu0 0
        %858 = vmatprep.subr.bf16.mxu0 0
        %859 = vmatpush1.bf16.msra.mxu0 0
        %860 = vmatprep.subr.bf16.mxu0 0
        %861 = vmatpush1.bf16.msra.mxu0 0
        %862 = vmatprep.subr.bf16.mxu0 0
        %863 = vmatpush1.bf16.msra.mxu0 0
        %864 = vmatprep.subr.bf16.mxu0 0
        %865 = vmatpush1.bf16.msra.mxu0 0
        %866 = vmatprep.subr.bf16.mxu0 0
        %867 = vmatpush1.bf16.msra.mxu0 0
        %868 = vmatprep.subr.bf16.mxu0 0
        %869 = vmatpush1.bf16.msra.mxu0 %v849
        %870 = vmatprep.subr.bf16.mxu0 0
        %871 = vmatpush1.bf16.msra.mxu0 %v848
        %872 = vmatprep.subr.bf16.mxu0 0
        %873 = vmatpush2.bf16.msra.mxu0 0
        %874 = vmatprep.subr.bf16.mxu0 0
        %875 = vmatpush2.bf16.msra.mxu0 0
        %876 = vmatprep.subr.bf16.mxu0 0
        %877 = vmatpush2.bf16.msra.mxu0 0
        %878 = vmatprep.subr.bf16.mxu0 0
        %879 = vmatpush2.bf16.msra.mxu0 0
        %880 = vmatprep.subr.bf16.mxu0 0
        %881 = vmatpush2.bf16.msra.mxu0 0
        %882 = vmatprep.subr.bf16.mxu0 0
        %883 = vmatpush2.bf16.msra.mxu0 0
        %884 = vmatprep.subr.bf16.mxu0 0
        %885 = vmatpush2.bf16.msra.mxu0 0
        %886 = vmatprep.subr.bf16.mxu0 0
        %887 = vmatpush2.bf16.msra.mxu0 0
        %888 = vmatprep.mubr.bf16.mxu0 0
        %889 = vmatmul.mubr.bf16.gmra.mxu0 %v854
        %v890 = vpop.f32.mrf.mxu0
        %v891 = vadd.f32 %v838, %v890
        %v892 = vpop.f32.mrf.mxu0
        %v893 = vpop.f32.mrf.mxu0
        %v894 = vpop.f32.mrf.mxu0
        %895 = vdwg.mxu0
        %vm896 = vcmask 257024
        %v897 = vsel %vm896, %v891, 0.0
        %898 = vadd.xlane.f32.xlu0 %v897
        %v899 = vpop.xlane.xlu0 %898
        %v900 = vrcp.pop 32.0
        %v901 = vmul.f32 %v899, %v900
        %v902 = vsub.f32 %v891, %v901
        %v903 = vmul.f32 %v902, %v902
        %v904 = vsel %vm896, %v903, 0.0
        %905 = vadd.xlane.f32.xlu0 %v904
        %v906 = vpop.xlane.xlu0 %905
        %v907 = vmul.f32 %v906, %v900
        %v908 = vadd.f32 %v907, 1e-05
        %v909 = vrsqrt.pop %v908
        %v910 = vmul.f32 %v902, %v909
        %v911 = vld [vmem:[#allocation7] sm:$0x1]
        %v913 = vlaneseq
        %v914 = vshrl.u32 %v913, 7
        %v915 = vsub.s32 0, %v914
        %v916 = vrot.slane %v911, %v915
        %v918 = vmul.f32 %v910, %v916
        %v919 = vld [vmem:[#allocation8] sm:$0x1]
        %v921 = vlaneseq
        %v922 = vshrl.u32 %v921, 7
        %v923 = vsub.s32 0, %v922
        %v924 = vrot.slane %v919, %v923
        %v926 = vadd.f32 %v918, %v924
        %v927 = vpack.c.bf16 %v827, %v827
        %v929 = vsel %vm852, %v927, 0
        %931 = vmatprep.subr.bf16.mxu0 0
        %932 = vmatpush1.bf16.msra.mxu0 0
        %933 = vmatprep.subr.bf16.mxu0 0
        %934 = vmatpush1.bf16.msra.mxu0 0
        %935 = vmatprep.subr.bf16.mxu0 0
        %936 = vmatpush1.bf16.msra.mxu0 0
        %937 = vmatprep.subr.bf16.mxu0 0
        %938 = vmatpush1.bf16.msra.mxu0 0
        %939 = vmatprep.subr.bf16.mxu0 0
        %940 = vmatpush1.bf16.msra.mxu0 0
        %941 = vmatprep.subr.bf16.mxu0 0
        %942 = vmatpush1.bf16.msra.mxu0 0
        %943 = vmatprep.subr.bf16.mxu0 0
        %944 = vmatpush1.bf16.msra.mxu0 %v849
        %945 = vmatprep.subr.bf16.mxu0 0
        %946 = vmatpush1.bf16.msra.mxu0 %v848
        %947 = vmatprep.subr.bf16.mxu0 0
        %948 = vmatpush2.bf16.msra.mxu0 0
        %949 = vmatprep.subr.bf16.mxu0 0
        %950 = vmatpush2.bf16.msra.mxu0 0
        %951 = vmatprep.subr.bf16.mxu0 0
        %952 = vmatpush2.bf16.msra.mxu0 0
        %953 = vmatprep.subr.bf16.mxu0 0
        %954 = vmatpush2.bf16.msra.mxu0 0
        %955 = vmatprep.subr.bf16.mxu0 0
        %956 = vmatpush2.bf16.msra.mxu0 0
        %957 = vmatprep.subr.bf16.mxu0 0
        %958 = vmatpush2.bf16.msra.mxu0 0
        %959 = vmatprep.subr.bf16.mxu0 0
        %960 = vmatpush2.bf16.msra.mxu0 0
        %961 = vmatprep.subr.bf16.mxu0 0
        %962 = vmatpush2.bf16.msra.mxu0 0
        %963 = vmatprep.mubr.bf16.mxu0 0
        %964 = vmatmul.mubr.bf16.gmra.mxu0 %v929
        %v965 = vpop.f32.mrf.mxu0
        %v966 = vadd.f32 %v838, %v965
        %v967 = vpop.f32.mrf.mxu0
        %v968 = vpop.f32.mrf.mxu0
        %v969 = vpop.f32.mrf.mxu0
        %970 = vdwg.mxu0
        %vm971 = vcmask 258048
        %v972 = vsel %vm971, %v966, 0.0
        %973 = vadd.xlane.f32.xlu0 %v972
        %v974 = vpop.xlane.xlu0 %973
        %v975 = vmul.f32 %v974, %v900
        %v976 = vsub.f32 %v966, %v975
        %v977 = vmul.f32 %v976, %v976
        %v978 = vsel %vm971, %v977, 0.0
        %979 = vadd.xlane.f32.xlu0 %v978
        %v980 = vpop.xlane.xlu0 %979
        %v981 = vmul.f32 %v980, %v900
        %v982 = vadd.f32 %v981, 1e-05
        %v983 = vrsqrt.pop %v982
        %v984 = vmul.f32 %v976, %v983
        %v985 = vmul.f32 %v984, %v916
        %v986 = vadd.f32 %v985, %v924
        %v987 = vpack.c.bf16 %v926, %v926
        %v988 = vpack.c.bf16 %v986, %v986
        %v989 = vld [vmem:[%s7] sm:$0xf]
        %v990 = vld [vmem:[%s7 + $0x4] sm:$0xf]
        %v991 = vld [vmem:[%s7 + $0x8] sm:$0xf]
        %v992 = vld [vmem:[%s7 + $0xc] sm:$0xf]
        %v993 = vld [vmem:[#allocation10] sm:$0x1]
        %v995 = vlaneseq
        %v996 = vshrl.u32 %v995, 7
        %v997 = vsub.s32 0, %v996
        %v998 = vrot.slane %v993, %v997
        %v1004 = vunpack.c.l.b16 %v989
        %v1005 = vunpack.c.l.b16 %v990
        %v1006 = vunpack.c.l.b16 %v991
        %v1007 = vunpack.c.l.b16 %v992
        %v1008 = vpack.c.b16 %v1005, %v1004
        %v1009 = vpack.c.b16 %v1007, %v1006
        %v1013 = vsel %vm852, %v987, 0
        %1015 = vmatprep.subr.bf16.mxu0 0
        %1016 = vmatpush1.bf16.msra.mxu0 0
        %1017 = vmatprep.subr.bf16.mxu0 0
        %1018 = vmatpush1.bf16.msra.mxu0 0
        %1019 = vmatprep.subr.bf16.mxu0 0
        %1020 = vmatpush1.bf16.msra.mxu0 0
        %1021 = vmatprep.subr.bf16.mxu0 0
        %1022 = vmatpush1.bf16.msra.mxu0 0
        %1023 = vmatprep.subr.bf16.mxu0 0
        %1024 = vmatpush1.bf16.msra.mxu0 0
        %1025 = vmatprep.subr.bf16.mxu0 0
        %1026 = vmatpush1.bf16.msra.mxu0 0
        %1027 = vmatprep.subr.bf16.mxu0 0
        %1028 = vmatpush1.bf16.msra.mxu0 %v1009
        %1029 = vmatprep.subr.bf16.mxu0 0
        %1030 = vmatpush1.bf16.msra.mxu0 %v1008
        %1031 = vmatprep.subr.bf16.mxu0 0
        %1032 = vmatpush2.bf16.msra.mxu0 0
        %1033 = vmatprep.subr.bf16.mxu0 0
        %1034 = vmatpush2.bf16.msra.mxu0 0
        %1035 = vmatprep.subr.bf16.mxu0 0
        %1036 = vmatpush2.bf16.msra.mxu0 0
        %1037 = vmatprep.subr.bf16.mxu0 0
        %1038 = vmatpush2.bf16.msra.mxu0 0
        %1039 = vmatprep.subr.bf16.mxu0 0
        %1040 = vmatpush2.bf16.msra.mxu0 0
        %1041 = vmatprep.subr.bf16.mxu0 0
        %1042 = vmatpush2.bf16.msra.mxu0 0
        %1043 = vmatprep.subr.bf16.mxu0 0
        %1044 = vmatpush2.bf16.msra.mxu0 0
        %1045 = vmatprep.subr.bf16.mxu0 0
        %1046 = vmatpush2.bf16.msra.mxu0 0
        %1047 = vmatprep.mubr.bf16.mxu0 0
        %1048 = vmatmul.mubr.bf16.gmra.mxu0 %v1013
        %v1049 = vpop.f32.mrf.mxu0
        %v1050 = vadd.f32 %v998, %v1049
        %v1051 = vpop.f32.mrf.mxu0
        %v1052 = vpop.f32.mrf.mxu0
        %v1053 = vpop.f32.mrf.mxu0
        %1054 = vdwg.mxu0
        %v1055 = vxor.u32 %v1050, 2147483648
        %v1056 = vmul.f32 %v1055, 1.442695
        %v1057 = vpow.pop %v1056
        %v1058 = vadd.f32 %v1057, 1.0
        %v1059 = vrcp.pop %v1058
        %v1060 = vmul.f32 1.0, %v1059
        %v1061 = vmul.f32 %v1050, %v1060
        %v1062 = vld [vmem:[%s9] sm:$0xf]
        %v1063 = vld [vmem:[%s9 + $0x4] sm:$0xf]
        %v1064 = vld [vmem:[%s9 + $0x8] sm:$0xf]
        %v1065 = vld [vmem:[%s9 + $0xc] sm:$0xf]
        %v1066 = vld [vmem:[#allocation11] sm:$0x1]
        %v1068 = vlaneseq
        %v1069 = vshrl.u32 %v1068, 7
        %v1070 = vsub.s32 0, %v1069
        %v1071 = vrot.slane %v1066, %v1070
        %v1077 = vunpack.c.l.b16 %v1062
        %v1078 = vunpack.c.l.b16 %v1063
        %v1079 = vunpack.c.l.b16 %v1064
        %v1080 = vunpack.c.l.b16 %v1065
        %v1081 = vpack.c.b16 %v1078, %v1077
        %v1082 = vpack.c.b16 %v1080, %v1079
        %1085 = vmatprep.subr.bf16.mxu0 0
        %1086 = vmatpush1.bf16.msra.mxu0 0
        %1087 = vmatprep.subr.bf16.mxu0 0
        %1088 = vmatpush1.bf16.msra.mxu0 0
        %1089 = vmatprep.subr.bf16.mxu0 0
        %1090 = vmatpush1.bf16.msra.mxu0 0
        %1091 = vmatprep.subr.bf16.mxu0 0
        %1092 = vmatpush1.bf16.msra.mxu0 0
        %1093 = vmatprep.subr.bf16.mxu0 0
        %1094 = vmatpush1.bf16.msra.mxu0 0
        %1095 = vmatprep.subr.bf16.mxu0 0
        %1096 = vmatpush1.bf16.msra.mxu0 0
        %1097 = vmatprep.subr.bf16.mxu0 0
        %1098 = vmatpush1.bf16.msra.mxu0 %v1082
        %1099 = vmatprep.subr.bf16.mxu0 0
        %1100 = vmatpush1.bf16.msra.mxu0 %v1081
        %1101 = vmatprep.subr.bf16.mxu0 0
        %1102 = vmatpush2.bf16.msra.mxu0 0
        %1103 = vmatprep.subr.bf16.mxu0 0
        %1104 = vmatpush2.bf16.msra.mxu0 0
        %1105 = vmatprep.subr.bf16.mxu0 0
        %1106 = vmatpush2.bf16.msra.mxu0 0
        %1107 = vmatprep.subr.bf16.mxu0 0
        %1108 = vmatpush2.bf16.msra.mxu0 0
        %1109 = vmatprep.subr.bf16.mxu0 0
        %1110 = vmatpush2.bf16.msra.mxu0 0
        %1111 = vmatprep.subr.bf16.mxu0 0
        %1112 = vmatpush2.bf16.msra.mxu0 0
        %1113 = vmatprep.subr.bf16.mxu0 0
        %1114 = vmatpush2.bf16.msra.mxu0 0
        %1115 = vmatprep.subr.bf16.mxu0 0
        %1116 = vmatpush2.bf16.msra.mxu0 0
        %1117 = vmatprep.mubr.bf16.mxu0 0
        %1118 = vmatmul.mubr.bf16.gmra.mxu0 %v1013
        %v1119 = vpop.f32.mrf.mxu0
        %v1120 = vadd.f32 %v1071, %v1119
        %v1121 = vpop.f32.mrf.mxu0
        %v1122 = vpop.f32.mrf.mxu0
        %v1123 = vpop.f32.mrf.mxu0
        %1124 = vdwg.mxu0
        %v1125 = vxor.u32 %v1120, 2147483648
        %v1126 = vmul.f32 %v1125, 1.442695
        %v1127 = vpow.pop %v1126
        %v1128 = vadd.f32 %v1127, 1.0
        %v1129 = vrcp.pop %v1128
        %v1130 = vmul.f32 1.0, %v1129
        %v1131 = vmul.f32 %v1120, %v1130
        %v1133 = vsel %vm852, %v988, 0
        %1135 = vmatprep.subr.bf16.mxu0 0
        %1136 = vmatpush1.bf16.msra.mxu0 0
        %1137 = vmatprep.subr.bf16.mxu0 0
        %1138 = vmatpush1.bf16.msra.mxu0 0
        %1139 = vmatprep.subr.bf16.mxu0 0
        %1140 = vmatpush1.bf16.msra.mxu0 0
        %1141 = vmatprep.subr.bf16.mxu0 0
        %1142 = vmatpush1.bf16.msra.mxu0 0
        %1143 = vmatprep.subr.bf16.mxu0 0
        %1144 = vmatpush1.bf16.msra.mxu0 0
        %1145 = vmatprep.subr.bf16.mxu0 0
        %1146 = vmatpush1.bf16.msra.mxu0 0
        %1147 = vmatprep.subr.bf16.mxu0 0
        %1148 = vmatpush1.bf16.msra.mxu0 %v1082
        %1149 = vmatprep.subr.bf16.mxu0 0
        %1150 = vmatpush1.bf16.msra.mxu0 %v1081
        %1151 = vmatprep.subr.bf16.mxu0 0
        %1152 = vmatpush2.bf16.msra.mxu0 0
        %1153 = vmatprep.subr.bf16.mxu0 0
        %1154 = vmatpush2.bf16.msra.mxu0 0
        %1155 = vmatprep.subr.bf16.mxu0 0
        %1156 = vmatpush2.bf16.msra.mxu0 0
        %1157 = vmatprep.subr.bf16.mxu0 0
        %1158 = vmatpush2.bf16.msra.mxu0 0
        %1159 = vmatprep.subr.bf16.mxu0 0
        %1160 = vmatpush2.bf16.msra.mxu0 0
        %1161 = vmatprep.subr.bf16.mxu0 0
        %1162 = vmatpush2.bf16.msra.mxu0 0
        %1163 = vmatprep.subr.bf16.mxu0 0
        %1164 = vmatpush2.bf16.msra.mxu0 0
        %1165 = vmatprep.subr.bf16.mxu0 0
        %1166 = vmatpush2.bf16.msra.mxu0 0
        %1167 = vmatprep.mubr.bf16.mxu0 0
        %1168 = vmatmul.mubr.bf16.gmra.mxu0 %v1133
        %v1169 = vpop.f32.mrf.mxu0
        %v1170 = vadd.f32 %v1071, %v1169
        %v1171 = vpop.f32.mrf.mxu0
        %v1172 = vpop.f32.mrf.mxu0
        %v1173 = vpop.f32.mrf.mxu0
        %1174 = vdwg.mxu0
        %v1175 = vxor.u32 %v1170, 2147483648
        %v1176 = vmul.f32 %v1175, 1.442695
        %v1177 = vpow.pop %v1176
        %v1178 = vadd.f32 %v1177, 1.0
        %v1179 = vrcp.pop %v1178
        %v1180 = vmul.f32 1.0, %v1179
        %v1181 = vmul.f32 %v1170, %v1180
        %v1182 = vld [vmem:[%s11] sm:$0xf]
        %v1183 = vld [vmem:[%s11 + $0x4] sm:$0xf]
        %v1184 = vld [vmem:[%s11 + $0x8] sm:$0xf]
        %v1185 = vld [vmem:[%s11 + $0xc] sm:$0xf]
        %v1186 = vld [vmem:[#allocation13] sm:$0x1]
        %v1188 = vlaneseq
        %v1189 = vshrl.u32 %v1188, 7
        %v1190 = vsub.s32 0, %v1189
        %v1191 = vrot.slane %v1186, %v1190
        %v1197 = vunpack.c.l.b16 %v1182
        %v1198 = vunpack.c.l.b16 %v1183
        %v1199 = vunpack.c.l.b16 %v1184
        %v1200 = vunpack.c.l.b16 %v1185
        %v1201 = vpack.c.b16 %v1198, %v1197
        %v1202 = vpack.c.b16 %v1200, %v1199
        %1205 = vmatprep.subr.bf16.mxu0 0
        %1206 = vmatpush1.bf16.msra.mxu0 0
        %1207 = vmatprep.subr.bf16.mxu0 0
        %1208 = vmatpush1.bf16.msra.mxu0 0
        %1209 = vmatprep.subr.bf16.mxu0 0
        %1210 = vmatpush1.bf16.msra.mxu0 0
        %1211 = vmatprep.subr.bf16.mxu0 0
        %1212 = vmatpush1.bf16.msra.mxu0 0
        %1213 = vmatprep.subr.bf16.mxu0 0
        %1214 = vmatpush1.bf16.msra.mxu0 0
        %1215 = vmatprep.subr.bf16.mxu0 0
        %1216 = vmatpush1.bf16.msra.mxu0 0
        %1217 = vmatprep.subr.bf16.mxu0 0
        %1218 = vmatpush1.bf16.msra.mxu0 %v1202
        %1219 = vmatprep.subr.bf16.mxu0 0
        %1220 = vmatpush1.bf16.msra.mxu0 %v1201
        %1221 = vmatprep.subr.bf16.mxu0 0
        %1222 = vmatpush2.bf16.msra.mxu0 0
        %1223 = vmatprep.subr.bf16.mxu0 0
        %1224 = vmatpush2.bf16.msra.mxu0 0
        %1225 = vmatprep.subr.bf16.mxu0 0
        %1226 = vmatpush2.bf16.msra.mxu0 0
        %1227 = vmatprep.subr.bf16.mxu0 0
        %1228 = vmatpush2.bf16.msra.mxu0 0
        %1229 = vmatprep.subr.bf16.mxu0 0
        %1230 = vmatpush2.bf16.msra.mxu0 0
        %1231 = vmatprep.subr.bf16.mxu0 0
        %1232 = vmatpush2.bf16.msra.mxu0 0
        %1233 = vmatprep.subr.bf16.mxu0 0
        %1234 = vmatpush2.bf16.msra.mxu0 0
        %1235 = vmatprep.subr.bf16.mxu0 0
        %1236 = vmatpush2.bf16.msra.mxu0 0
        %1237 = vmatprep.mubr.bf16.mxu0 0
        %1238 = vmatmul.mubr.bf16.gmra.mxu0 %v1133
        %v1239 = vpop.f32.mrf.mxu0
        %v1240 = vadd.f32 %v1191, %v1239
        %v1241 = vpop.f32.mrf.mxu0
        %v1242 = vpop.f32.mrf.mxu0
        %v1243 = vpop.f32.mrf.mxu0
        %1244 = vdwg.mxu0
        %v1245 = vxor.u32 %v1240, 2147483648
        %v1246 = vmul.f32 %v1245, 1.442695
        %v1247 = vpow.pop %v1246
        %v1248 = vadd.f32 %v1247, 1.0
        %v1249 = vrcp.pop %v1248
        %v1250 = vmul.f32 1.0, %v1249
        %v1251 = vmul.f32 %v1240, %v1250
        %v1252 = vld [vmem:[#allocation14] sm:$0x7]
        %v1253 = vld [vmem:[#allocation16] sm:$0x7]
        %v1254 = vlaneseq
        %v1255 = vshrl.u32 %v1254, 7
        %v1256 = vsub.s32 0, %v1255
        %v1257 = vrot.slane %v1252, %v1256
        %v1258 = vmul.f32 %v1131, %v1257
        %v1259 = vlaneseq
        %v1260 = vshrl.u32 %v1259, 7
        %v1261 = vsub.s32 0, %v1260
        %v1262 = vrot.slane %v1253, %v1261
        %v1263 = vadd.f32 %v1258, %v1262
        %v1264 = vlaneseq
        %v1265 = vshrl.u32 %v1264, 7
        %v1266 = vsub.s32 1, %v1265
        %v1267 = vrot.slane %v1252, %v1266
        %v1268 = vmul.f32 %v1131, %v1267
        %v1269 = vlaneseq
        %v1270 = vshrl.u32 %v1269, 7
        %v1271 = vsub.s32 1, %v1270
        %v1272 = vrot.slane %v1253, %v1271
        %v1273 = vadd.f32 %v1268, %v1272
        %v1274 = vlaneseq
        %v1275 = vshrl.u32 %v1274, 7
        %v1276 = vsub.s32 2, %v1275
        %v1277 = vrot.slane %v1252, %v1276
        %v1278 = vmul.f32 %v1181, %v1277
        %v1279 = vlaneseq
        %v1280 = vshrl.u32 %v1279, 7
        %v1281 = vsub.s32 2, %v1280
        %v1282 = vrot.slane %v1253, %v1281
        %v1283 = vadd.f32 %v1278, %v1282
        %v1284 = vld [vmem:[%s15] sm:$0xff]
        %v1285 = vld [vmem:[%s15 + $0x8] sm:$0x3]
        %v1287 = vsel %vm852, %v1273, 0
        %v1290 = vsel %vm852, %v1284, 0
        %v1293 = vsel %vm852, %v1285, 0
        %1295 = vmatprep.subr.mxu0 0.0
        %1296 = vmatpush1.xpose.msra.mxu0 0.0
        %1297 = vmatprep.subr.mxu0 0.0
        %1298 = vmatpush1.xpose.msra.mxu0 0.0
        %1299 = vmatprep.subr.mxu0 0.0
        %1300 = vmatpush1.xpose.msra.mxu0 0.0
        %1301 = vmatprep.subr.mxu0 0.0
        %1302 = vmatpush1.xpose.msra.mxu0 0.0
        %1303 = vmatprep.subr.mxu0 0.0
        %1304 = vmatpush1.xpose.msra.mxu0 0.0
        %1305 = vmatprep.subr.mxu0 0.0
        %1306 = vmatpush1.xpose.msra.mxu0 0.0
        %1307 = vmatprep.subr.mxu0 0.0
        %1308 = vmatpush1.xpose.msra.mxu0 0.0
        %1309 = vmatprep.subr.mxu0 0.0
        %1310 = vmatpush1.xpose.msra.mxu0 0.0
        %1311 = vmatprep.subr.mxu0 0.0
        %1312 = vmatpush1.xpose.msra.mxu0 0.0
        %1313 = vmatprep.subr.mxu0 0.0
        %1314 = vmatpush1.xpose.msra.mxu0 0.0
        %1315 = vmatprep.subr.mxu0 0.0
        %1316 = vmatpush1.xpose.msra.mxu0 0.0
        %1317 = vmatprep.subr.mxu0 0.0
        %1318 = vmatpush1.xpose.msra.mxu0 0.0
        %1319 = vmatprep.subr.mxu0 0.0
        %1320 = vmatpush1.xpose.msra.mxu0 0.0
        %1321 = vmatprep.subr.mxu0 0.0
        %1322 = vmatpush1.xpose.msra.mxu0 0.0
        %1323 = vmatprep.subr.mxu0 0.0
        %1324 = vmatpush1.xpose.msra.mxu0 %v1293
        %1325 = vmatprep.subr.mxu0 0.0
        %1326 = vmatpush1.xpose.msra.mxu0 %v1290
        %1327 = vmatprep.subr.mxu0 0.0
        %1328 = vmatpush2.xpose.msra.mxu0 0.0
        %1329 = vmatprep.subr.mxu0 0.0
        %1330 = vmatpush2.xpose.msra.mxu0 0.0
        %1331 = vmatprep.subr.mxu0 0.0
        %1332 = vmatpush2.xpose.msra.mxu0 0.0
        %1333 = vmatprep.subr.mxu0 0.0
        %1334 = vmatpush2.xpose.msra.mxu0 0.0
        %1335 = vmatprep.subr.mxu0 0.0
        %1336 = vmatpush2.xpose.msra.mxu0 0.0
        %1337 = vmatprep.subr.mxu0 0.0
        %1338 = vmatpush2.xpose.msra.mxu0 0.0
        %1339 = vmatprep.subr.mxu0 0.0
        %1340 = vmatpush2.xpose.msra.mxu0 0.0
        %1341 = vmatprep.subr.mxu0 0.0
        %1342 = vmatpush2.xpose.msra.mxu0 0.0
        %1343 = vmatprep.subr.mxu0 0.0
        %1344 = vmatpush2.xpose.msra.mxu0 0.0
        %1345 = vmatprep.subr.mxu0 0.0
        %1346 = vmatpush2.xpose.msra.mxu0 0.0
        %1347 = vmatprep.subr.mxu0 0.0
        %1348 = vmatpush2.xpose.msra.mxu0 0.0
        %1349 = vmatprep.subr.mxu0 0.0
        %1350 = vmatpush2.xpose.msra.mxu0 0.0
        %1351 = vmatprep.subr.mxu0 0.0
        %1352 = vmatpush2.xpose.msra.mxu0 0.0
        %1353 = vmatprep.subr.mxu0 0.0
        %1354 = vmatpush2.xpose.msra.mxu0 0.0
        %1355 = vmatprep.subr.mxu0 0.0
        %1356 = vmatpush2.xpose.msra.mxu0 0.0
        %1357 = vmatprep.subr.mxu0 0.0
        %1358 = vmatpush2.xpose.msra.mxu0 0.0
        %1359 = vmatprep.mubr.f32.mxu0 0.0
        %1360 = vmatmul.mubr.f32.gmra.mxu0 %v1287
        %v1361 = vpop.f32.mrf.mxu0
        %v1362 = vadd.f32 0.0, %v1361
        %v1363 = vpop.f32.mrf.mxu0
        %1364 = vdwg.mxu0
        %v1365 = vld [vmem:[%s722] sm:$0x1]
        %v1366 = vunpack.c.0.s8 %v1365
        %1368 = vset.pattern.permute.xlu0 0
        %1369 = vperm.xlu0 %1368, %v1362
        %v1370 = vpop.permute.xlu0 %1369
        %vm1372 = vcmp.eq.s32.totalorder %v1366, 1
        %1373 = vset.pattern.permute.xlu0 1
        %1374 = vperm.xlu0 %1373, %v1362
        %v1375 = vpop.permute.xlu0 %1374
        %v1377 = vsel %vm1372, %v1375, %v1370
        %vm1378 = vcmp.eq.s32.totalorder %v1366, 2
        %1379 = vset.pattern.permute.xlu0 2
        %1380 = vperm.xlu0 %1379, %v1362
        %v1381 = vpop.permute.xlu0 %1380
        %v1383 = vsel %vm1378, %v1381, %v1377
        %vm1384 = vcmp.eq.s32.totalorder %v1366, 3
        %1385 = vset.pattern.permute.xlu0 3
        %1386 = vperm.xlu0 %1385, %v1362
        %v1387 = vpop.permute.xlu0 %1386
        %v1389 = vsel %vm1384, %v1387, %v1383
        %vm1390 = vcmp.eq.s32.totalorder %v1366, 4
        %1391 = vset.pattern.permute.xlu0 4
        %1392 = vperm.xlu0 %1391, %v1362
        %v1393 = vpop.permute.xlu0 %1392
        %v1395 = vsel %vm1390, %v1393, %v1389
        %vm1396 = vcmp.eq.s32.totalorder %v1366, 5
        %1397 = vset.pattern.permute.xlu0 5
        %1398 = vperm.xlu0 %1397, %v1362
        %v1399 = vpop.permute.xlu0 %1398
        %v1401 = vsel %vm1396, %v1399, %v1395
        %vm1402 = vcmp.eq.s32.totalorder %v1366, 6
        %1403 = vset.pattern.permute.xlu0 6
        %1404 = vperm.xlu0 %1403, %v1362
        %v1405 = vpop.permute.xlu0 %1404
        %v1407 = vsel %vm1402, %v1405, %v1401
        %vm1408 = vcmp.eq.s32.totalorder %v1366, 7
        %1409 = vset.pattern.permute.xlu0 7
        %1410 = vperm.xlu0 %1409, %v1362
        %v1411 = vpop.permute.xlu0 %1410
        %v1413 = vsel %vm1408, %v1411, %v1407
        %vm1414 = vcmp.eq.s32.totalorder %v1366, 8
        %1415 = vset.pattern.permute.xlu0 8
        %1416 = vperm.xlu0 %1415, %v1362
        %v1417 = vpop.permute.xlu0 %1416
        %v1419 = vsel %vm1414, %v1417, %v1413
        %vm1420 = vcmp.eq.s32.totalorder %v1366, 9
        %1421 = vset.pattern.permute.xlu0 9
        %1422 = vperm.xlu0 %1421, %v1362
        %v1423 = vpop.permute.xlu0 %1422
        %v1425 = vsel %vm1420, %v1423, %v1419
        %v1427 = vsel %vm852, %v1263, 0
        %v1430 = vsel %vm852, %v1283, 0
        %1432 = vmatprep.subr.mxu0 0.0
        %1433 = vmatpush1.xpose.msra.mxu0 0.0
        %1434 = vmatprep.subr.mxu0 0.0
        %1435 = vmatpush1.xpose.msra.mxu0 0.0
        %1436 = vmatprep.subr.mxu0 0.0
        %1437 = vmatpush1.xpose.msra.mxu0 0.0
        %1438 = vmatprep.subr.mxu0 0.0
        %1439 = vmatpush1.xpose.msra.mxu0 0.0
        %1440 = vmatprep.subr.mxu0 0.0
        %1441 = vmatpush1.xpose.msra.mxu0 0.0
        %1442 = vmatprep.subr.mxu0 0.0
        %1443 = vmatpush1.xpose.msra.mxu0 0.0
        %1444 = vmatprep.subr.mxu0 0.0
        %1445 = vmatpush1.xpose.msra.mxu0 0.0
        %1446 = vmatprep.subr.mxu0 0.0
        %1447 = vmatpush1.xpose.msra.mxu0 0.0
        %1448 = vmatprep.subr.mxu0 0.0
        %1449 = vmatpush1.xpose.msra.mxu0 0.0
        %1450 = vmatprep.subr.mxu0 0.0
        %1451 = vmatpush1.xpose.msra.mxu0 0.0
        %1452 = vmatprep.subr.mxu0 0.0
        %1453 = vmatpush1.xpose.msra.mxu0 0.0
        %1454 = vmatprep.subr.mxu0 0.0
        %1455 = vmatpush1.xpose.msra.mxu0 0.0
        %1456 = vmatprep.subr.mxu0 0.0
        %1457 = vmatpush1.xpose.msra.mxu0 0.0
        %1458 = vmatprep.subr.mxu0 0.0
        %1459 = vmatpush1.xpose.msra.mxu0 0.0
        %1460 = vmatprep.subr.mxu0 0.0
        %1461 = vmatpush1.xpose.msra.mxu0 0.0
        %1462 = vmatprep.subr.mxu0 0.0
        %1463 = vmatpush1.xpose.msra.mxu0 %v1430
        %1464 = vmatprep.subr.mxu0 0.0
        %1465 = vmatpush2.xpose.msra.mxu0 0.0
        %1466 = vmatprep.subr.mxu0 0.0
        %1467 = vmatpush2.xpose.msra.mxu0 0.0
        %1468 = vmatprep.subr.mxu0 0.0
        %1469 = vmatpush2.xpose.msra.mxu0 0.0
        %1470 = vmatprep.subr.mxu0 0.0
        %1471 = vmatpush2.xpose.msra.mxu0 0.0
        %1472 = vmatprep.subr.mxu0 0.0
        %1473 = vmatpush2.xpose.msra.mxu0 0.0
        %1474 = vmatprep.subr.mxu0 0.0
        %1475 = vmatpush2.xpose.msra.mxu0 0.0
        %1476 = vmatprep.subr.mxu0 0.0
        %1477 = vmatpush2.xpose.msra.mxu0 0.0
        %1478 = vmatprep.subr.mxu0 0.0
        %1479 = vmatpush2.xpose.msra.mxu0 0.0
        %1480 = vmatprep.subr.mxu0 0.0
        %1481 = vmatpush2.xpose.msra.mxu0 0.0
        %1482 = vmatprep.subr.mxu0 0.0
        %1483 = vmatpush2.xpose.msra.mxu0 0.0
        %1484 = vmatprep.subr.mxu0 0.0
        %1485 = vmatpush2.xpose.msra.mxu0 0.0
        %1486 = vmatprep.subr.mxu0 0.0
        %1487 = vmatpush2.xpose.msra.mxu0 0.0
        %1488 = vmatprep.subr.mxu0 0.0
        %1489 = vmatpush2.xpose.msra.mxu0 0.0
        %1490 = vmatprep.subr.mxu0 0.0
        %1491 = vmatpush2.xpose.msra.mxu0 0.0
        %1492 = vmatprep.subr.mxu0 0.0
        %1493 = vmatpush2.xpose.msra.mxu0 0.0
        %1494 = vmatprep.subr.mxu0 0.0
        %1495 = vmatpush2.xpose.msra.mxu0 0.0
        %1496 = vmatprep.mubr.f32.mxu0 0.0
        %1497 = vmatmul.mubr.f32.gmra.mxu0 %v1427
        %v1498 = vpop.f32.mrf.mxu0
        %v1499 = vadd.f32 %v1425, %v1498
        %v1500 = vpop.f32.mrf.mxu0
        %1501 = vdwg.mxu0
        %v1502 = vmul.f32 %v1499, 0.125
        %vm1503 = vcmp.lt.s32.totalorder %v1366, 0
        %v1504 = vsel %vm1503, -9999.0, %v1502
        %vm1505 = vcmask 35840
        %v1506 = vsel %vm1505, %v1504, -inf
        %1507 = vmax.xlane.f32.xlu0 %v1506
        %v1508 = vpop.xlane.xlu0 %1507
        %v1509 = vsub.f32 %v1504, %v1508
        %v1510 = vmul.f32 %v1509, 1.442695
        %v1511 = vpow.pop %v1510
        %v1512 = vsel %vm1505, %v1511, 0.0
        %1513 = vadd.xlane.f32.xlu0 %v1512
        %v1514 = vpop.xlane.xlu0 %1513
        %v1515 = vrcp.pop %v1514
        %v1516 = vmul.f32 %v1511, %v1515
        %v1517 = vpack.c.bf16 %v1516, %v1516
        %v1518 = vpack.c.bf16 %v1251, %v1251
        %vm1519 = vcmask 39936
        %v1521 = vsel %vm1519, %v1517, 0
        %vm1523 = vcmask 1041408
        %vm1524 = vcmask 1042432
        %v1525 = vsel %vm1523, 4294967295, 65535
        %v1526 = vsel %vm1524, %v1525, 0
        %v1528 = vand.u32 %v1518, %v1526
        %1530 = vmatprep.subr.bf16.mxu0 0
        %1531 = vmatpush1.bf16.msra.mxu0 0
        %1532 = vmatprep.subr.bf16.mxu0 0
        %1533 = vmatpush1.bf16.msra.mxu0 0
        %1534 = vmatprep.subr.bf16.mxu0 0
        %1535 = vmatpush1.bf16.msra.mxu0 0
        %1536 = vmatprep.subr.bf16.mxu0 0
        %1537 = vmatpush1.bf16.msra.mxu0 0
        %1538 = vmatprep.subr.bf16.mxu0 0
        %1539 = vmatpush1.bf16.msra.mxu0 0
        %1540 = vmatprep.subr.bf16.mxu0 0
        %1541 = vmatpush1.bf16.msra.mxu0 0
        %1542 = vmatprep.subr.bf16.mxu0 0
        %1543 = vmatpush1.bf16.msra.mxu0 0
        %1544 = vmatprep.subr.bf16.mxu0 0
        %1545 = vmatpush1.bf16.msra.mxu0 %v1528
        %1546 = vmatprep.subr.bf16.mxu0 0
        %1547 = vmatpush2.bf16.msra.mxu0 0
        %1548 = vmatprep.subr.bf16.mxu0 0
        %1549 = vmatpush2.bf16.msra.mxu0 0
        %1550 = vmatprep.subr.bf16.mxu0 0
        %1551 = vmatpush2.bf16.msra.mxu0 0
        %1552 = vmatprep.subr.bf16.mxu0 0
        %1553 = vmatpush2.bf16.msra.mxu0 0
        %1554 = vmatprep.subr.bf16.mxu0 0
        %1555 = vmatpush2.bf16.msra.mxu0 0
        %1556 = vmatprep.subr.bf16.mxu0 0
        %1557 = vmatpush2.bf16.msra.mxu0 0
        %1558 = vmatprep.subr.bf16.mxu0 0
        %1559 = vmatpush2.bf16.msra.mxu0 0
        %1560 = vmatprep.subr.bf16.mxu0 0
        %1561 = vmatpush2.bf16.msra.mxu0 0
        %1562 = vmatprep.mubr.bf16.mxu0 0
        %1563 = vmatmul.mubr.bf16.gmra.mxu0 %v1521
        %v1564 = vpop.f32.mrf.mxu0
        %v1565 = vadd.f32 0.0, %v1564
        %v1566 = vpop.f32.mrf.mxu0
        %v1567 = vpop.f32.mrf.mxu0
        %v1568 = vpop.f32.mrf.mxu0
        %1569 = vdwg.mxu0
        %v1570 = vmul.f32 %v1061, %v1565
        %v1571 = vpack.c.bf16 %v1570, %v1570
        %v1572 = vld [vmem:[%s16] sm:$0xf]
        %v1573 = vld [vmem:[%s16 + $0x4] sm:$0xf]
        %v1574 = vld [vmem:[%s16 + $0x8] sm:$0xf]
        %v1575 = vld [vmem:[%s16 + $0xc] sm:$0xf]
        %v1576 = vld [vmem:[%s16 + $0x10] sm:$0xf]
        %v1577 = vld [vmem:[%s16 + $0x14] sm:$0xf]
        %v1578 = vld [vmem:[%s16 + $0x18] sm:$0xf]
        %v1579 = vld [vmem:[%s16 + $0x1c] sm:$0xf]
        %v1580 = vld [vmem:[%s17] sm:$0x1]
        %v1582 = vlaneseq
        %v1583 = vshrl.u32 %v1582, 7
        %v1584 = vsub.s32 0, %v1583
        %v1585 = vrot.slane %v1580, %v1584
        %v1595 = vunpack.c.l.b16 %v1572
        %v1596 = vunpack.c.l.b16 %v1573
        %v1597 = vunpack.c.l.b16 %v1574
        %v1598 = vunpack.c.l.b16 %v1575
        %v1599 = vunpack.c.l.b16 %v1576
        %v1600 = vunpack.c.l.b16 %v1577
        %v1601 = vunpack.c.l.b16 %v1578
        %v1602 = vunpack.c.l.b16 %v1579
        %v1603 = vpack.c.b16 %v1596, %v1595
        %v1604 = vpack.c.b16 %v1598, %v1597
        %v1605 = vpack.c.b16 %v1600, %v1599
        %v1606 = vpack.c.b16 %v1602, %v1601
        %vm1611 = vcmask 523264
        %v1613 = vsel %vm1611, %v1571, 0
        %1615 = vmatprep.subr.bf16.mxu0 0
        %1616 = vmatpush1.bf16.msra.mxu0 0
        %1617 = vmatprep.subr.bf16.mxu0 0
        %1618 = vmatpush1.bf16.msra.mxu0 0
        %1619 = vmatprep.subr.bf16.mxu0 0
        %1620 = vmatpush1.bf16.msra.mxu0 0
        %1621 = vmatprep.subr.bf16.mxu0 0
        %1622 = vmatpush1.bf16.msra.mxu0 0
        %1623 = vmatprep.subr.bf16.mxu0 0
        %1624 = vmatpush1.bf16.msra.mxu0 %v1606
        %1625 = vmatprep.subr.bf16.mxu0 0
        %1626 = vmatpush1.bf16.msra.mxu0 %v1605
        %1627 = vmatprep.subr.bf16.mxu0 0
        %1628 = vmatpush1.bf16.msra.mxu0 %v1604
        %1629 = vmatprep.subr.bf16.mxu0 0
        %1630 = vmatpush1.bf16.msra.mxu0 %v1603
        %1631 = vmatprep.subr.bf16.mxu0 0
        %1632 = vmatpush2.bf16.msra.mxu0 0
        %1633 = vmatprep.subr.bf16.mxu0 0
        %1634 = vmatpush2.bf16.msra.mxu0 0
        %1635 = vmatprep.subr.bf16.mxu0 0
        %1636 = vmatpush2.bf16.msra.mxu0 0
        %1637 = vmatprep.subr.bf16.mxu0 0
        %1638 = vmatpush2.bf16.msra.mxu0 0
        %1639 = vmatprep.subr.bf16.mxu0 0
        %1640 = vmatpush2.bf16.msra.mxu0 0
        %1641 = vmatprep.subr.bf16.mxu0 0
        %1642 = vmatpush2.bf16.msra.mxu0 0
        %1643 = vmatprep.subr.bf16.mxu0 0
        %1644 = vmatpush2.bf16.msra.mxu0 0
        %1645 = vmatprep.subr.bf16.mxu0 0
        %1646 = vmatpush2.bf16.msra.mxu0 0
        %1647 = vmatprep.mubr.bf16.mxu0 0
        %1648 = vmatmul.mubr.bf16.gmra.mxu0 %v1613
        %v1649 = vpop.f32.mrf.mxu0
        %v1650 = vadd.f32 %v1585, %v1649
        %v1651 = vpop.f32.mrf.mxu0
        %v1652 = vpop.f32.mrf.mxu0
        %v1653 = vpop.f32.mrf.mxu0
        %1654 = vdwg.mxu0
        %v1655 = vpack.c.bf16 %v1650, %v1650
        %v1656 = vld [vmem:[%s18] sm:$0xf]
        %v1657 = vld [vmem:[%s18 + $0x4] sm:$0xf]
        %v1658 = vld [vmem:[%s18 + $0x8] sm:$0xf]
        %v1659 = vld [vmem:[%s18 + $0xc] sm:$0xf]
        %v1660 = vld [vmem:[#allocation17] sm:$0xf]
        %v1661 = vld [vmem:[#allocation17 + $0x4] sm:$0xf]
        %v1662 = vld [vmem:[#allocation17 + $0x8] sm:$0xf]
        %v1663 = vld [vmem:[#allocation17 + $0xc] sm:$0xf]
        %v1668 = vunpack.c.l.b16 %v1660
        %v1669 = vunpack.c.l.b16 %v1661
        %v1670 = vunpack.c.l.b16 %v1662
        %v1671 = vunpack.c.l.b16 %v1663
        %v1672 = vpack.c.b16 %v1669, %v1668
        %v1673 = vpack.c.b16 %v1671, %v1670
        %1676 = vmatprep.subr.bf16.mxu0 0
        %1677 = vmatpush1.bf16.msra.mxu0 0
        %1678 = vmatprep.subr.bf16.mxu0 0
        %1679 = vmatpush1.bf16.msra.mxu0 0
        %1680 = vmatprep.subr.bf16.mxu0 0
        %1681 = vmatpush1.bf16.msra.mxu0 0
        %1682 = vmatprep.subr.bf16.mxu0 0
        %1683 = vmatpush1.bf16.msra.mxu0 0
        %1684 = vmatprep.subr.bf16.mxu0 0
        %1685 = vmatpush1.bf16.msra.mxu0 0
        %1686 = vmatprep.subr.bf16.mxu0 0
        %1687 = vmatpush1.bf16.msra.mxu0 0
        %1688 = vmatprep.subr.bf16.mxu0 0
        %1689 = vmatpush1.bf16.msra.mxu0 %v1673
        %1690 = vmatprep.subr.bf16.mxu0 0
        %1691 = vmatpush1.bf16.msra.mxu0 %v1672
        %1692 = vmatprep.subr.bf16.mxu0 0
        %1693 = vmatpush2.bf16.msra.mxu0 0
        %1694 = vmatprep.subr.bf16.mxu0 0
        %1695 = vmatpush2.bf16.msra.mxu0 0
        %1696 = vmatprep.subr.bf16.mxu0 0
        %1697 = vmatpush2.bf16.msra.mxu0 0
        %1698 = vmatprep.subr.bf16.mxu0 0
        %1699 = vmatpush2.bf16.msra.mxu0 0
        %1700 = vmatprep.subr.bf16.mxu0 0
        %1701 = vmatpush2.bf16.msra.mxu0 0
        %1702 = vmatprep.subr.bf16.mxu0 0
        %1703 = vmatpush2.bf16.msra.mxu0 0
        %1704 = vmatprep.subr.bf16.mxu0 0
        %1705 = vmatpush2.bf16.msra.mxu0 0
        %1706 = vmatprep.subr.bf16.mxu0 0
        %1707 = vmatpush2.bf16.msra.mxu0 0
        %1708 = vmatprep.mubr.bf16.mxu0 0
        %1709 = vmatmul.mubr.bf16.gmra.mxu0 %v854
        %v1710 = vpop.f32.mrf.mxu0
        %v1711 = vadd.f32 0.0, %v1710
        %v1712 = vpop.f32.mrf.mxu0
        %v1713 = vpop.f32.mrf.mxu0
        %v1714 = vpop.f32.mrf.mxu0
        %1715 = vdwg.mxu0
        %v1720 = vunpack.c.l.b16 %v1656
        %v1721 = vunpack.c.l.b16 %v1657
        %v1722 = vunpack.c.l.b16 %v1658
        %v1723 = vunpack.c.l.b16 %v1659
        %v1724 = vpack.c.b16 %v1721, %v1720
        %v1725 = vpack.c.b16 %v1723, %v1722
        %v1729 = vsel %vm852, %v1655, 0
        %1731 = vmatprep.subr.bf16.mxu0 0
        %1732 = vmatpush1.bf16.msra.mxu0 0
        %1733 = vmatprep.subr.bf16.mxu0 0
        %1734 = vmatpush1.bf16.msra.mxu0 0
        %1735 = vmatprep.subr.bf16.mxu0 0
        %1736 = vmatpush1.bf16.msra.mxu0 0
        %1737 = vmatprep.subr.bf16.mxu0 0
        %1738 = vmatpush1.bf16.msra.mxu0 0
        %1739 = vmatprep.subr.bf16.mxu0 0
        %1740 = vmatpush1.bf16.msra.mxu0 0
        %1741 = vmatprep.subr.bf16.mxu0 0
        %1742 = vmatpush1.bf16.msra.mxu0 0
        %1743 = vmatprep.subr.bf16.mxu0 0
        %1744 = vmatpush1.bf16.msra.mxu0 %v1725
        %1745 = vmatprep.subr.bf16.mxu0 0
        %1746 = vmatpush1.bf16.msra.mxu0 %v1724
        %1747 = vmatprep.subr.bf16.mxu0 0
        %1748 = vmatpush2.bf16.msra.mxu0 0
        %1749 = vmatprep.subr.bf16.mxu0 0
        %1750 = vmatpush2.bf16.msra.mxu0 0
        %1751 = vmatprep.subr.bf16.mxu0 0
        %1752 = vmatpush2.bf16.msra.mxu0 0
        %1753 = vmatprep.subr.bf16.mxu0 0
        %1754 = vmatpush2.bf16.msra.mxu0 0
        %1755 = vmatprep.subr.bf16.mxu0 0
        %1756 = vmatpush2.bf16.msra.mxu0 0
        %1757 = vmatprep.subr.bf16.mxu0 0
        %1758 = vmatpush2.bf16.msra.mxu0 0
        %1759 = vmatprep.subr.bf16.mxu0 0
        %1760 = vmatpush2.bf16.msra.mxu0 0
        %1761 = vmatprep.subr.bf16.mxu0 0
        %1762 = vmatpush2.bf16.msra.mxu0 0
        %1763 = vmatprep.mubr.bf16.mxu0 0
        %1764 = vmatmul.mubr.bf16.gmra.mxu0 %v1729
        %v1765 = vpop.f32.mrf.mxu0
        %v1766 = vadd.f32 %v1711, %v1765
        %v1767 = vpop.f32.mrf.mxu0
        %v1768 = vpop.f32.mrf.mxu0
        %v1769 = vpop.f32.mrf.mxu0
        %1770 = vdwg.mxu0
        %v1771 = vld [vmem:[%s20] sm:$0x1]
        %v1773 = vlaneseq
        %v1774 = vshrl.u32 %v1773, 7
        %v1775 = vsub.s32 0, %v1774
        %v1776 = vrot.slane %v1771, %v1775
        %v1778 = vadd.f32 %v1766, %v1776
        %v1779 = vxor.u32 %v1778, 2147483648
        %v1780 = vmul.f32 %v1779, 1.442695
        %v1781 = vpow.pop %v1780
        %v1782 = vadd.f32 %v1781, 1.0
        %v1783 = vrcp.pop %v1782
        %v1784 = vmul.f32 1.0, %v1783
        %v1785 = vmul.f32 %v1784, %v1650
        %v1786 = vsub.f32 1.0, %v1784
        %v1787 = vmul.f32 %v1786, %v826
        %v1788 = vadd.f32 %v1785, %v1787
        %1789 = vst.msk [vmem:[%s820] sm:$0xf] %vm896, %v1788
        %s1790 = sand.u32 %s509, 1
        %s1791 = scalar_lea.sflag [#allocation4], %s1790
        %s1792 = sand.u32 %s509, 1
        %s1793 = smul.addr %s1792, 4
        %s1794 = scalar_lea.vmem [#allocation19], %s1793
        // Predicated region
        $region145: #{tpu_custom_call.1} parent=103 // pred_check
          %p1795 = pneg %p519
        $region146: #{tpu_custom_call.1} parent=103 // pred_check_branch
          %1797 = sbr.rel (%p1795) target = $region148
        $region147: #{tpu_custom_call.1} parent=103 // pred_region
          %s1799 = ssub.s32 64, 64
          %1800 = vsyncadd %s1791, %s1799
          %s1801 = smul.addr %s45, 64
          %s1802 = scalar_lea.hbm %s21, %s1801
          %s1804 = sshll.u32 %s1794, 4
          %s1805 = int_to_ptr.vmem [resolvable:$true] %s1804
          %1807 = dma.vmem_to_hbm [thread:$0]  %s1805, 64, %s1802, %s1791
        $region148: #{tpu_custom_call.1} parent=103 // pred_fallthru
          _
      $region104: #{tpu_custom_call.1} parent=5 // pred_fallthru
        _
      %p1808 = scmp.le.s32.totalorder 2, %s40
      // Predicated region
      $region149: #{tpu_custom_call.1} parent=5 // pred_check
        %p1809 = pneg %p1808
      $region150: #{tpu_custom_call.1} parent=5 // pred_check_branch
        %1811 = sbr.rel (%p1809) target = $region152
      $region151: #{tpu_custom_call.1} parent=5 // pred_region
        %s1812 = ssub.s32 %s40, 2
        // Predicated region
        $region153: #{tpu_custom_call.1} parent=151 // pred_check
          %p1813 = pneg %p525
        $region154: #{tpu_custom_call.1} parent=151 // pred_check_branch
          %1815 = sbr.rel (%p1813) target = $region156
        $region155: #{tpu_custom_call.1} parent=151 // pred_region
          %s1816 = sand.u32 %s510, 1
          %s1817 = scalar_lea.sflag [#allocation4], %s1816
          %s1818 = sand.u32 %s510, 1
          %s1819 = smul.addr %s1818, 4
          %s1820 = scalar_lea.vmem [#allocation19], %s1819
          %1821 = dma.done %s1817, 64
        $region156: #{tpu_custom_call.1} parent=151 // pred_fallthru
          _
      $region152: #{tpu_custom_call.1} parent=5 // pred_fallthru
        _
    $region6: #{tpu_custom_call.1} parent=1 // loop_footer
      %s44 = sadd.s32 1, %s40
    $region7: #{tpu_custom_call.1} parent=1 // loop_footer_branch
      %39 = sbr.rel target = $region3
    $region8: #{tpu_custom_call.1} parent=1 // loop_exit
      _
    %1822 = vsyncpa [#allocation3], 1
    %s1823 = scalar_lea.sflag [#allocation3], 1
    %1824 = vsyncpa %s1823, 1
    %1825 = vsyncpa [#allocation6], 1
    %s1826 = scalar_lea.sflag [#allocation6], 1
    %1827 = vsyncpa %s1826, 1
    %1828 = vsyncpa [#allocation9], 1
    %1829 = vsyncpa [#allocation12], 1
    %1830 = vsyncpa [#allocation15], 1
    %1831 = vsyncpa [#allocation18], 1
    %1832 = vsyncpa [#allocation4], 1
    %s1833 = scalar_lea.sflag [#allocation4], 1
    %1834 = vsyncpa %s1833, 1

</llo_original>
